<compile_context>
chip_gen: v5e
topology: v5e:2x2
jax: 0.10.0
libtpu: 0.0.40
codegen_flags: <defaults>
</compile_context>

<pallas_src>
import functools

import numpy as np
import jax
import jax.numpy as jnp
from jax.experimental import pallas as pl
from jax.experimental.pallas import tpu as pltpu

# ---------------------------------------------------------------------------
# Configuration (small shapes, consistent with the module's constructor)
# ---------------------------------------------------------------------------
NUM_JOINTS = 8          # num_joints_in == num_joints_out
IN_FEATURES = 2
N_FC = 128              # n_fully_connected (small for the example)
N_LAYERS = 2            # number of ResLayers in the trunk
DICT_BASIS = 12         # dict_basis_size
BATCH = 2
N_SAMPLE = 4            # cycle-consistency resampling factor
WEIGHT_STD = 0.01
BN_EPS = 1e-5

J = NUM_JOINTS
HEAD_W = 128            # lane-dense packed head output width
SHAPE_OFF = 0           # [shape_planar(3J) | alpha(DICT) | rot(3) | zero pad]
ALPHA_OFF = 3 * J
ROT_OFF = ALPHA_OFF + DICT_BASIS


# ---------------------------------------------------------------------------
# Fused Pallas kernel: trunk x2 + heads + re-rotation + cycle mpjpe
# ---------------------------------------------------------------------------
def make_teacher_kernel(ba, n_layers, align_to_root):

    def kernel(x1_ref, w0_ref, wt_ref, bt_ref, wh_ref, bh_ref, rr_ref,
               head1_ref, cyc_ref, u_scr, xy_scr):
        f32 = jnp.float32
        bf16 = jnp.bfloat16

        def lin(h, w_bf16, b_f32):
            # bf16 MXU operands, f32 accumulate, f32 bias add
            return jnp.dot(h.astype(bf16), w_bf16,
                           preferred_element_type=f32) + b_f32

        def trunk(h):
            # ResLayers: (conv-bn-relu) x2 -> conv-bn -> +skip -> relu
            # bottleneck weights are zero-padded to 128 lanes at init, so all
            # intermediate tiles are lane-dense (rows, 128).
            for l in range(n_layers):
                base = 3 * l
                res = h
                t = jnp.maximum(lin(h, wt_ref[base], bt_ref[base + 1]), 0.0)
                t = jnp.maximum(lin(t, wt_ref[base + 1], bt_ref[base + 2]), 0.0)
                t = lin(t, wt_ref[base + 2], bt_ref[base + 3]) + res
                h = jnp.maximum(t, 0.0)
            return h

        def heads(h):
            # one matmul for all heads (shape folded through alpha), packed
            # into a single 128-lane block.
            return lin(h, wh_ref[...], bh_ref[...])

        b0 = bt_ref[0]                              # (1, 128) f32

        # ---------------- pass 1: the `ba` real input rows ------------------
        h = jnp.maximum(lin(x1_ref[...], w0_ref[...], b0), 0.0)
        h = trunk(h)
        head1 = heads(h)                            # (ba, 128) f32
        head1_ref[...] = head1                      # lane-dense packed output

        # Replicate the packed (ba, 3J) shape block to ba*N_SAMPLE rows with
        # N_SAMPLE static sub-row stores into a VMEM scratch (no replication
        # matmuls, no reshape/concat).  Root alignment commutes with
        # replication, so it is applied after.
        s_pack = head1[:, SHAPE_OFF:SHAPE_OFF + 3 * J]          # (ba, 3J)
        for s in range(N_SAMPLE):
            u_scr[s * ba:(s + 1) * ba, :] = s_pack
        u_pack = u_scr[...]                                     # (rows2, 3J)
        ux = u_pack[:, 0:J]
        uy = u_pack[:, J:2 * J]
        uz = u_pack[:, 2 * J:3 * J]
        if align_to_root:
            ux = ux - ux[:, 0:1]
            uy = uy - uy[:, 0:1]
            uz = uz - uz[:, 0:1]

        # ------- rotate by the random rotations -----------------------------
        # rr_ref is the lane-expanded (rows2, 128) slab: element k of the
        # row-major 3x3 occupies lanes [k*J, (k+1)*J), so each coefficient is
        # an aligned 8-lane slice (no 1-lane extract + lane broadcast).
        rr = rr_ref[...]

        def rc(k):
            return rr[:, k * J:(k + 1) * J]                     # (rows2, J)

        rx = ux * rc(0) + uy * rc(3) + uz * rc(6)
        ry = ux * rc(1) + uy * rc(4) + uz * rc(7)
        rz = ux * rc(2) + uy * rc(5) + uz * rc(8)

        # perspective projection (clamped), same as the PyTorch forward
        inv = 1.0 / jnp.maximum(5.0 + rz, 1.0)
        px2d = rx * inv
        py2d = ry * inv

        # ---------------- pass 2: ba*N_SAMPLE re-projected rows -------------
        # stage [px2d | py2d] (planar, matching w0's row order) so layer 0 is
        # a single K=16 MXU push against the full bf16 w0.
        xy_scr[:, 0:J] = px2d
        xy_scr[:, J:2 * J] = py2d
        h2 = jnp.maximum(lin(xy_scr[...], w0_ref[...], b0), 0.0)
        h2 = trunk(h2)
        head2 = heads(h2)                                       # (rows2, 128)

        qx = head2[:, SHAPE_OFF:SHAPE_OFF + J]
        qy = head2[:, SHAPE_OFF + J:SHAPE_OFF + 2 * J]
        qz = head2[:, SHAPE_OFF + 2 * J:SHAPE_OFF + 3 * J]

        # cycle-consistency mpjpe (mean per-joint L2 distance) fused in-kernel
        d2 = (qx - ux) ** 2 + (qy - uy) ** 2 + (qz - uz) ** 2
        cyc = jnp.mean(jnp.sqrt(d2), keepdims=True)             # (1, 1)
        # lane-dense broadcast write (no masked single-element store)
        cyc_ref[...] = jnp.broadcast_to(cyc, (1, HEAD_W))

    return kernel


def fused_forward(packed, x1_planar, rr_exp, align_to_root):
    """Single pallas_call for the whole Teacher_net compute graph."""
    w0, wt, bt, wh, bh = packed
    ba = x1_planar.shape[0]
    rows2 = ba * N_SAMPLE
    vmem = pl.BlockSpec(memory_space=pltpu.MemorySpace.VMEM)
    kernel = make_teacher_kernel(ba, N_LAYERS, align_to_root)
    out_shape = (
        jax.ShapeDtypeStruct((ba, HEAD_W), jnp.float32),   # packed heads
        jax.ShapeDtypeStruct((1, HEAD_W), jnp.float32),    # cycle loss (lane 0)
    )

    # advisory cost estimate so XLA can overlap the tiny glue ops around the
    # custom call with the kernel itself.
    flops = 2 * (ba + rows2) * (2 * J * N_FC + (3 * N_LAYERS + 1) * N_FC * N_FC)
    bytes_in = sum(int(a.size) * a.dtype.itemsize
                   for a in (x1_planar, w0, wt, bt, wh, bh, rr_exp))
    bytes_out = (ba + 1) * HEAD_W * 4
    cost = pl.CostEstimate(flops=int(flops),
                           transcendentals=int(2 * rows2 * J),
                           bytes_accessed=int(bytes_in + bytes_out))

    # NOTE(v7x): if BATCH/N_SAMPLE grow, add a row-block grid (rows multiple
    # of 8, ideally 128-512) with dimension_semantics=("parallel",) to use the
    # second TensorCore; weight slabs stay whole per block (~0.25 MB).
    return pl.pallas_call(
        kernel,
        out_shape=out_shape,
        in_specs=[vmem] * 7,
        out_specs=(vmem, vmem),
        scratch_shapes=[
            pltpu.VMEM((rows2, 3 * J), jnp.float32),   # replicated shape block
            pltpu.VMEM((rows2, 2 * J), jnp.float32),   # pass-2 layer-0 input
        ],
        cost_estimate=cost,
    )(x1_planar, w0, wt, bt, wh, bh, rr_exp)


# ---------------------------------------------------------------------------
# Plain-JAX glue (tiny 3x3 rotation math + reprojection mpjpe, <200 floats)
# ---------------------------------------------------------------------------
def hat(v):
    z = jnp.zeros_like(v[:, 0])
    return jnp.stack([
        jnp.stack([z, -v[:, 2], v[:, 1]], axis=-1),
        jnp.stack([v[:, 2], z, -v[:, 0]], axis=-1),
        jnp.stack([-v[:, 1], v[:, 0], z], axis=-1),
    ], axis=-2)


def so3_exponential_map(log_rot, eps=1e-4):
    nrms = jnp.sum(log_rot * log_rot, axis=1)
    ang = jnp.sqrt(jnp.maximum(nrms, eps))
    ang_inv = 1.0 / ang
    fac1 = ang_inv * jnp.sin(ang)
    fac2 = (ang_inv ** 2) * (1.0 - jnp.cos(ang))
    K = hat(log_rot)
    KK = jnp.einsum('bij,bjk->bik', K, K)
    return fac1[:, None, None] * K + fac2[:, None, None] * KK + jnp.eye(3)[None]


def rand_rot(key, n, max_rot_angle, axes=(1.0, 1.0, 1.0)):
    k1, k2 = jax.random.split(key)
    axis = jax.random.normal(k1, (n, 3), jnp.float32) * jnp.asarray(axes, jnp.float32)
    angle = jax.random.uniform(k2, (n,), jnp.float32, 0.0, max_rot_angle)
    axis = axis / jnp.maximum(jnp.linalg.norm(axis, axis=1, keepdims=True), 1e-8)
    return so3_exponential_map(axis * angle[:, None])


def mpjpe_jax(a, b):
    return jnp.mean(jnp.sqrt(jnp.sum((a - b) ** 2, axis=-1)))


# ---------------------------------------------------------------------------
# Parameter init: BN folded, heads fused, slabs padded to 128 lanes
# ---------------------------------------------------------------------------
def init_packed_params(key):
    planes = N_FC // 4
    n_bn = 1 + 3 * N_LAYERS
    keys = jax.random.split(key, n_bn + 3)

    def conv(k, cin, cout):
        w = jax.random.normal(k, (cin, cout), jnp.float32) * WEIGHT_STD
        return w, jnp.zeros((cout,), jnp.float32)

    def conv_bn(k, cin, cout):
        kw, kg = jax.random.split(k)
        w, b = conv(kw, cin, cout)
        gamma = jax.random.uniform(kg, (cout,), jnp.float32)        # U(0, 1)
        # eval-mode BN fold: y = gamma*(x-mean)/sqrt(var+eps)+beta, with fresh
        # stats mean=0, var=1, beta=0  ->  W*=scale, b*=scale.
        scale = gamma / jnp.sqrt(1.0 + BN_EPS)
        return w * scale[None, :], b * scale

    def pad_mat(w):
        out = jnp.zeros((N_FC, N_FC), jnp.float32)
        return out.at[:w.shape[0], :w.shape[1]].set(w)

    def pad_vec(b):
        out = jnp.zeros((N_FC,), jnp.float32)
        return out.at[:b.shape[0]].set(b)

    # trunk layer 0 (ConvBNLayer); permute rows from the PyTorch interleaved
    # flatten [x0,y0,x1,y1,...] to planar [x0..x7, y0..y7].
    w0, b0 = conv_bn(keys[0], 2 * NUM_JOINTS, N_FC)
    perm_in = np.arange(2 * NUM_JOINTS).reshape(NUM_JOINTS, 2).T.reshape(-1)
    w0 = w0[perm_in, :]

    wt_list, bt_list = [], [b0]
    ki = 1
    for _ in range(N_LAYERS):                                       # ResLayers
        for cin, cout in ((N_FC, planes), (planes, planes), (planes, N_FC)):
            w, b = conv_bn(keys[ki], cin, cout)
            ki += 1
            wt_list.append(pad_mat(w))        # zero-pad bottleneck to 128 lanes
            bt_list.append(pad_vec(b))
    wt = jnp.stack(wt_list).astype(jnp.bfloat16)                    # (6,128,128)
    bt = jnp.stack(bt_list)[:, None, :]                             # (7,1,128)

    # heads: fold shape_layer into alpha_layer (no nonlinearity between them)
    w_alpha, b_alpha = conv(keys[ki], N_FC, DICT_BASIS); ki += 1
    w_shape, b_shape = conv(keys[ki], DICT_BASIS, 3 * NUM_JOINTS); ki += 1
    w_rot, b_rot = conv(keys[ki], N_FC, 3); ki += 1
    # TODO(synk): trans_layer exists in the module but is unused by forward().

    perm_out = np.arange(3 * NUM_JOINTS).reshape(NUM_JOINTS, 3).T.reshape(-1)
    w_as = (w_alpha @ w_shape)[:, perm_out]                         # (128, 24)
    b_as = (b_alpha @ w_shape + b_shape)[perm_out]

    wh = jnp.zeros((N_FC, HEAD_W), jnp.float32)
    wh = wh.at[:, SHAPE_OFF:SHAPE_OFF + 3 * NUM_JOINTS].set(w_as)
    wh = wh.at[:, ALPHA_OFF:ALPHA_OFF + DICT_BASIS].set(w_alpha)
    wh = wh.at[:, ROT_OFF:ROT_OFF + 3].set(w_rot)
    bh = jnp.zeros((HEAD_W,), jnp.float32)
    bh = bh.at[SHAPE_OFF:SHAPE_OFF + 3 * NUM_JOINTS].set(b_as)
    bh = bh.at[ALPHA_OFF:ALPHA_OFF + DICT_BASIS].set(b_alpha)
    bh = bh.at[ROT_OFF:ROT_OFF + 3].set(b_rot)

    return (w0.astype(jnp.bfloat16),           # (16,128)   bf16 (MXU-only use)
            wt,                                # (6,128,128) bf16
            bt.astype(jnp.float32),            # (7,1,128)  f32
            wh.astype(jnp.bfloat16),           # (128,128)  bf16
            bh[None, :].astype(jnp.float32))   # (1,128)    f32


# ---------------------------------------------------------------------------
# Teacher_net.forward
# ---------------------------------------------------------------------------
@functools.partial(jax.jit, static_argnames=("align_to_root",))
def teacher_forward(packed, input_2d, key, align_to_root=False):
    assert input_2d.shape[1] == NUM_JOINTS
    assert input_2d.shape[2] == IN_FEATURES
    ba = input_2d.shape[0]
    preds = {}

    # normalize_keypoints
    kp_mean = input_2d[:, 0, :]
    x_norm = input_2d - kp_mean[:, None, :]
    preds['keypoints_2d'] = x_norm
    preds['kp_mean'] = kp_mean

    # planar flattening [x0..x7, y0..y7] (layer-0 weight rows permuted
    # identically at init, so semantics match the interleaved PyTorch view).
    x1_planar = jnp.transpose(x_norm, (0, 2, 1)).reshape(ba, 2 * NUM_JOINTS)
    x1_planar = x1_planar.astype(jnp.float32)

    # random rotations for the cycle-consistency branch, lane-expanded so the
    # kernel never does 1-lane extracts: element k of the row-major 3x3 is
    # repeated over lanes [k*J, (k+1)*J), zero-padded to 128 lanes.
    # TODO(synk): fold this into the kernel via pltpu.prng_* to cut dispatches.
    R_rand = rand_rot(key, ba * N_SAMPLE, 3.1415926)
    rr9 = R_rand.reshape(ba * N_SAMPLE, 9).astype(jnp.float32)
    rr_exp = jnp.repeat(rr9, J, axis=1)                          # (rows2, 72)
    rr_exp = jnp.pad(rr_exp, ((0, 0), (0, HEAD_W - 9 * J)))      # (rows2, 128)

    head1, l_cyc = fused_forward(packed, x1_planar, rr_exp, align_to_root)

    shape_coeff = head1[:, ALPHA_OFF:ALPHA_OFF + DICT_BASIS]
    shape_planar = head1[:, SHAPE_OFF:SHAPE_OFF + 3 * NUM_JOINTS]
    shape_invariant = shape_planar.reshape(ba, 3, NUM_JOINTS).transpose(0, 2, 1)
    R_log = head1[:, ROT_OFF:ROT_OFF + 3]

    # camera / reprojection glue kept in plain JAX (needs sin/cos of a kernel
    # output; a handful of ops on <200 floats).
    R = so3_exponential_map(R_log)
    T = jnp.zeros((ba, 3), jnp.float32)
    shape_camera_coord = jnp.einsum('bjc,bck->bjk', shape_invariant, R) + T[:, None, :]
    z = shape_camera_coord[:, :, 2:3]
    shape_image_coord = shape_camera_coord[:, :, 0:2] / jnp.maximum(5.0 + z, 1.0)

    preds['camera'] = R
    preds['shape_camera_coord'] = shape_camera_coord
    preds['shape_coeff'] = shape_coeff
    preds['shape_invariant'] = shape_invariant
    preds['l_reprojection'] = mpjpe_jax(shape_image_coord, x_norm)
    preds['align'] = align_to_root
    preds['l_cycle_consistent'] = l_cyc[0, 0]
    return preds


# ---------------------------------------------------------------------------
if __name__ == "__main__":
    root_key = jax.random.PRNGKey(0)
    k_param, k_input, k_rot = jax.random.split(root_key, 3)

    packed = init_packed_params(k_param)
    input_2d = jax.random.normal(k_input, (BATCH, NUM_JOINTS, IN_FEATURES), jnp.float32)

    preds = teacher_forward(packed, input_2d, k_rot)
    jax.block_until_ready(preds)

    assert preds['shape_camera_coord'].shape == (BATCH, NUM_JOINTS, 3)
    assert preds['shape_invariant'].shape == (BATCH, NUM_JOINTS, 3)
    assert preds['shape_coeff'].shape == (BATCH, DICT_BASIS)
    assert preds['camera'].shape == (BATCH, 3, 3)
    assert preds['l_reprojection'].shape == ()
    assert preds['l_cycle_consistent'].shape == ()
    assert bool(jnp.isfinite(preds['l_reprojection']))
    assert bool(jnp.isfinite(preds['l_cycle_consistent']))
    print("KERNEL_OK")
</pallas_src>

<mosaic_0001>
module attributes {stable_mosaic.version = 11 : i64} {
  func.func @kernel(%arg0: memref<2x16xf32, #tpu.memory_space<vmem>>, %arg1: memref<16x128xbf16, #tpu.memory_space<vmem>>, %arg2: memref<6x128x128xbf16, #tpu.memory_space<vmem>>, %arg3: memref<7x1x128xf32, #tpu.memory_space<vmem>>, %arg4: memref<128x128xbf16, #tpu.memory_space<vmem>>, %arg5: memref<1x128xf32, #tpu.memory_space<vmem>>, %arg6: memref<8x128xf32, #tpu.memory_space<vmem>>, %arg7: memref<2x128xf32, #tpu.memory_space<vmem>>, %arg8: memref<1x128xf32, #tpu.memory_space<vmem>>, %arg9: memref<8x24xf32, #tpu.memory_space<vmem>>, %arg10: memref<8x16xf32, #tpu.memory_space<vmem>>) attributes {dimension_semantics = [], scalar_prefetch = 0 : i64, scratch_operands = 2 : i64, tpu.core_type = #tpu.core_type<tc>} {
    %c0 = arith.constant 0 : index
    %c0_0 = arith.constant 0 : index
    %c0_1 = arith.constant 0 : index
    %0 = vector.load %arg3[%c0, %c0_0, %c0_1] : memref<7x1x128xf32, #tpu.memory_space<vmem>>, vector<1x1x128xf32>
    %1 = vector.shape_cast %0 : vector<1x1x128xf32> to vector<1x128xf32>
    %c0_2 = arith.constant 0 : index
    %c0_3 = arith.constant 0 : index
    %2 = vector.load %arg0[%c0_2, %c0_3] : memref<2x16xf32, #tpu.memory_space<vmem>>, vector<2x16xf32>
    %c0_4 = arith.constant 0 : index
    %c0_5 = arith.constant 0 : index
    %3 = vector.load %arg1[%c0_4, %c0_5] : memref<16x128xbf16, #tpu.memory_space<vmem>>, vector<16x128xbf16>
    %4 = arith.truncf %2 : vector<2x16xf32> to vector<2x16xbf16>
    %cst = arith.constant dense<0.000000e+00> : vector<2x128xf32>
    %5 = tpu.matmul %4, %3, %cst {dimension_numbers = #tpu.dot_dimension_numbers<[1], [0], [0], [1], [0, 0, 1, 1], [], []>} : vector<2x16xbf16>, vector<16x128xbf16>, vector<2x128xf32> -> vector<2x128xf32>
    %6 = vector.broadcast %1 : vector<1x128xf32> to vector<2x128xf32>
    %7 = arith.addf %5, %6 : vector<2x128xf32>
    %cst_6 = arith.constant 0.000000e+00 : f32
    %8 = vector.broadcast %cst_6 : f32 to vector<2x128xf32>
    %9 = arith.maximumf %7, %8 : vector<2x128xf32>
    %c0_7 = arith.constant 0 : index
    %c0_8 = arith.constant 0 : index
    %c0_9 = arith.constant 0 : index
    %10 = vector.load %arg2[%c0_7, %c0_8, %c0_9] : memref<6x128x128xbf16, #tpu.memory_space<vmem>>, vector<1x128x128xbf16>
    %11 = vector.shape_cast %10 : vector<1x128x128xbf16> to vector<128x128xbf16>
    %c1 = arith.constant 1 : index
    %c0_10 = arith.constant 0 : index
    %c0_11 = arith.constant 0 : index
    %12 = vector.load %arg3[%c1, %c0_10, %c0_11] : memref<7x1x128xf32, #tpu.memory_space<vmem>>, vector<1x1x128xf32>
    %13 = vector.shape_cast %12 : vector<1x1x128xf32> to vector<1x128xf32>
    %14 = arith.truncf %9 : vector<2x128xf32> to vector<2x128xbf16>
    %cst_12 = arith.constant dense<0.000000e+00> : vector<2x128xf32>
    %15 = tpu.matmul %14, %11, %cst_12 {dimension_numbers = #tpu.dot_dimension_numbers<[1], [0], [0], [1], [0, 0, 1, 1], [], []>} : vector<2x128xbf16>, vector<128x128xbf16>, vector<2x128xf32> -> vector<2x128xf32>
    %16 = vector.broadcast %13 : vector<1x128xf32> to vector<2x128xf32>
    %17 = arith.addf %15, %16 : vector<2x128xf32>
    %cst_13 = arith.constant 0.000000e+00 : f32
    %18 = vector.broadcast %cst_13 : f32 to vector<2x128xf32>
    %19 = arith.maximumf %17, %18 : vector<2x128xf32>
    %c1_14 = arith.constant 1 : index
    %c0_15 = arith.constant 0 : index
    %c0_16 = arith.constant 0 : index
    %20 = vector.load %arg2[%c1_14, %c0_15, %c0_16] : memref<6x128x128xbf16, #tpu.memory_space<vmem>>, vector<1x128x128xbf16>
    %21 = vector.shape_cast %20 : vector<1x128x128xbf16> to vector<128x128xbf16>
    %c2 = arith.constant 2 : index
    %c0_17 = arith.constant 0 : index
    %c0_18 = arith.constant 0 : index
    %22 = vector.load %arg3[%c2, %c0_17, %c0_18] : memref<7x1x128xf32, #tpu.memory_space<vmem>>, vector<1x1x128xf32>
    %23 = vector.shape_cast %22 : vector<1x1x128xf32> to vector<1x128xf32>
    %24 = arith.truncf %19 : vector<2x128xf32> to vector<2x128xbf16>
    %cst_19 = arith.constant dense<0.000000e+00> : vector<2x128xf32>
    %25 = tpu.matmul %24, %21, %cst_19 {dimension_numbers = #tpu.dot_dimension_numbers<[1], [0], [0], [1], [0, 0, 1, 1], [], []>} : vector<2x128xbf16>, vector<128x128xbf16>, vector<2x128xf32> -> vector<2x128xf32>
    %26 = vector.broadcast %23 : vector<1x128xf32> to vector<2x128xf32>
    %27 = arith.addf %25, %26 : vector<2x128xf32>
    %cst_20 = arith.constant 0.000000e+00 : f32
    %28 = vector.broadcast %cst_20 : f32 to vector<2x128xf32>
    %29 = arith.maximumf %27, %28 : vector<2x128xf32>
    %c2_21 = arith.constant 2 : index
    %c0_22 = arith.constant 0 : index
    %c0_23 = arith.constant 0 : index
    %30 = vector.load %arg2[%c2_21, %c0_22, %c0_23] : memref<6x128x128xbf16, #tpu.memory_space<vmem>>, vector<1x128x128xbf16>
    %31 = vector.shape_cast %30 : vector<1x128x128xbf16> to vector<128x128xbf16>
    %c3 = arith.constant 3 : index
    %c0_24 = arith.constant 0 : index
    %c0_25 = arith.constant 0 : index
    %32 = vector.load %arg3[%c3, %c0_24, %c0_25] : memref<7x1x128xf32, #tpu.memory_space<vmem>>, vector<1x1x128xf32>
    %33 = vector.shape_cast %32 : vector<1x1x128xf32> to vector<1x128xf32>
    %34 = arith.truncf %29 : vector<2x128xf32> to vector<2x128xbf16>
    %cst_26 = arith.constant dense<0.000000e+00> : vector<2x128xf32>
    %35 = tpu.matmul %34, %31, %cst_26 {dimension_numbers = #tpu.dot_dimension_numbers<[1], [0], [0], [1], [0, 0, 1, 1], [], []>} : vector<2x128xbf16>, vector<128x128xbf16>, vector<2x128xf32> -> vector<2x128xf32>
    %36 = vector.broadcast %33 : vector<1x128xf32> to vector<2x128xf32>
    %37 = arith.addf %35, %36 : vector<2x128xf32>
    %38 = arith.addf %37, %9 : vector<2x128xf32>
    %cst_27 = arith.constant 0.000000e+00 : f32
    %39 = vector.broadcast %cst_27 : f32 to vector<2x128xf32>
    %40 = arith.maximumf %38, %39 : vector<2x128xf32>
    %c3_28 = arith.constant 3 : index
    %c0_29 = arith.constant 0 : index
    %c0_30 = arith.constant 0 : index
    %41 = vector.load %arg2[%c3_28, %c0_29, %c0_30] : memref<6x128x128xbf16, #tpu.memory_space<vmem>>, vector<1x128x128xbf16>
    %42 = vector.shape_cast %41 : vector<1x128x128xbf16> to vector<128x128xbf16>
    %c4 = arith.constant 4 : index
    %c0_31 = arith.constant 0 : index
    %c0_32 = arith.constant 0 : index
    %43 = vector.load %arg3[%c4, %c0_31, %c0_32] : memref<7x1x128xf32, #tpu.memory_space<vmem>>, vector<1x1x128xf32>
    %44 = vector.shape_cast %43 : vector<1x1x128xf32> to vector<1x128xf32>
    %45 = arith.truncf %40 : vector<2x128xf32> to vector<2x128xbf16>
    %cst_33 = arith.constant dense<0.000000e+00> : vector<2x128xf32>
    %46 = tpu.matmul %45, %42, %cst_33 {dimension_numbers = #tpu.dot_dimension_numbers<[1], [0], [0], [1], [0, 0, 1, 1], [], []>} : vector<2x128xbf16>, vector<128x128xbf16>, vector<2x128xf32> -> vector<2x128xf32>
    %47 = vector.broadcast %44 : vector<1x128xf32> to vector<2x128xf32>
    %48 = arith.addf %46, %47 : vector<2x128xf32>
    %cst_34 = arith.constant 0.000000e+00 : f32
    %49 = vector.broadcast %cst_34 : f32 to vector<2x128xf32>
    %50 = arith.maximumf %48, %49 : vector<2x128xf32>
    %c4_35 = arith.constant 4 : index
    %c0_36 = arith.constant 0 : index
    %c0_37 = arith.constant 0 : index
    %51 = vector.load %arg2[%c4_35, %c0_36, %c0_37] : memref<6x128x128xbf16, #tpu.memory_space<vmem>>, vector<1x128x128xbf16>
    %52 = vector.shape_cast %51 : vector<1x128x128xbf16> to vector<128x128xbf16>
    %c5 = arith.constant 5 : index
    %c0_38 = arith.constant 0 : index
    %c0_39 = arith.constant 0 : index
    %53 = vector.load %arg3[%c5, %c0_38, %c0_39] : memref<7x1x128xf32, #tpu.memory_space<vmem>>, vector<1x1x128xf32>
    %54 = vector.shape_cast %53 : vector<1x1x128xf32> to vector<1x128xf32>
    %55 = arith.truncf %50 : vector<2x128xf32> to vector<2x128xbf16>
    %cst_40 = arith.constant dense<0.000000e+00> : vector<2x128xf32>
    %56 = tpu.matmul %55, %52, %cst_40 {dimension_numbers = #tpu.dot_dimension_numbers<[1], [0], [0], [1], [0, 0, 1, 1], [], []>} : vector<2x128xbf16>, vector<128x128xbf16>, vector<2x128xf32> -> vector<2x128xf32>
    %57 = vector.broadcast %54 : vector<1x128xf32> to vector<2x128xf32>
    %58 = arith.addf %56, %57 : vector<2x128xf32>
    %cst_41 = arith.constant 0.000000e+00 : f32
    %59 = vector.broadcast %cst_41 : f32 to vector<2x128xf32>
    %60 = arith.maximumf %58, %59 : vector<2x128xf32>
    %c5_42 = arith.constant 5 : index
    %c0_43 = arith.constant 0 : index
    %c0_44 = arith.constant 0 : index
    %61 = vector.load %arg2[%c5_42, %c0_43, %c0_44] : memref<6x128x128xbf16, #tpu.memory_space<vmem>>, vector<1x128x128xbf16>
    %62 = vector.shape_cast %61 : vector<1x128x128xbf16> to vector<128x128xbf16>
    %c6 = arith.constant 6 : index
    %c0_45 = arith.constant 0 : index
    %c0_46 = arith.constant 0 : index
    %63 = vector.load %arg3[%c6, %c0_45, %c0_46] : memref<7x1x128xf32, #tpu.memory_space<vmem>>, vector<1x1x128xf32>
    %64 = vector.shape_cast %63 : vector<1x1x128xf32> to vector<1x128xf32>
    %65 = arith.truncf %60 : vector<2x128xf32> to vector<2x128xbf16>
    %cst_47 = arith.constant dense<0.000000e+00> : vector<2x128xf32>
    %66 = tpu.matmul %65, %62, %cst_47 {dimension_numbers = #tpu.dot_dimension_numbers<[1], [0], [0], [1], [0, 0, 1, 1], [], []>} : vector<2x128xbf16>, vector<128x128xbf16>, vector<2x128xf32> -> vector<2x128xf32>
    %67 = vector.broadcast %64 : vector<1x128xf32> to vector<2x128xf32>
    %68 = arith.addf %66, %67 : vector<2x128xf32>
    %69 = arith.addf %68, %40 : vector<2x128xf32>
    %cst_48 = arith.constant 0.000000e+00 : f32
    %70 = vector.broadcast %cst_48 : f32 to vector<2x128xf32>
    %71 = arith.maximumf %69, %70 : vector<2x128xf32>
    %c0_49 = arith.constant 0 : index
    %c0_50 = arith.constant 0 : index
    %72 = vector.load %arg4[%c0_49, %c0_50] : memref<128x128xbf16, #tpu.memory_space<vmem>>, vector<128x128xbf16>
    %c0_51 = arith.constant 0 : index
    %c0_52 = arith.constant 0 : index
    %73 = vector.load %arg5[%c0_51, %c0_52] : memref<1x128xf32, #tpu.memory_space<vmem>>, vector<1x128xf32>
    %74 = arith.truncf %71 : vector<2x128xf32> to vector<2x128xbf16>
    %cst_53 = arith.constant dense<0.000000e+00> : vector<2x128xf32>
    %75 = tpu.matmul %74, %72, %cst_53 {dimension_numbers = #tpu.dot_dimension_numbers<[1], [0], [0], [1], [0, 0, 1, 1], [], []>} : vector<2x128xbf16>, vector<128x128xbf16>, vector<2x128xf32> -> vector<2x128xf32>
    %76 = vector.broadcast %73 : vector<1x128xf32> to vector<2x128xf32>
    %77 = arith.addf %75, %76 : vector<2x128xf32>
    %c0_54 = arith.constant 0 : index
    %c0_55 = arith.constant 0 : index
    %78 = vector.load %arg7[%c0_54, %c0_55] : memref<2x128xf32, #tpu.memory_space<vmem>>, vector<2x128xf32>
    tpu.vector_store %arg7[%c0_54, %c0_55], %77 {strides = array<i32>} : memref<2x128xf32, #tpu.memory_space<vmem>>, vector<2x128xf32>,
    %79 = vector.extract_strided_slice %77 {offsets = [0, 0], sizes = [2, 24], strides = [1, 1]} : vector<2x128xf32> to vector<2x24xf32>
    %c0_56 = arith.constant 0 : index
    %c0_57 = arith.constant 0 : index
    %80 = vector.load %arg9[%c0_56, %c0_57] : memref<8x24xf32, #tpu.memory_space<vmem>>, vector<2x24xf32>
    tpu.vector_store %arg9[%c0_56, %c0_57], %79 {strides = array<i32>} : memref<8x24xf32, #tpu.memory_space<vmem>>, vector<2x24xf32>,
    %c2_58 = arith.constant 2 : index
    %c0_59 = arith.constant 0 : index
    %81 = vector.load %arg9[%c2_58, %c0_59] : memref<8x24xf32, #tpu.memory_space<vmem>>, vector<2x24xf32>
    tpu.vector_store %arg9[%c2_58, %c0_59], %79 {strides = array<i32>} : memref<8x24xf32, #tpu.memory_space<vmem>>, vector<2x24xf32>,
    %c4_60 = arith.constant 4 : index
    %c0_61 = arith.constant 0 : index
    %82 = vector.load %arg9[%c4_60, %c0_61] : memref<8x24xf32, #tpu.memory_space<vmem>>, vector<2x24xf32>
    tpu.vector_store %arg9[%c4_60, %c0_61], %79 {strides = array<i32>} : memref<8x24xf32, #tpu.memory_space<vmem>>, vector<2x24xf32>,
    %c6_62 = arith.constant 6 : index
    %c0_63 = arith.constant 0 : index
    %83 = vector.load %arg9[%c6_62, %c0_63] : memref<8x24xf32, #tpu.memory_space<vmem>>, vector<2x24xf32>
    tpu.vector_store %arg9[%c6_62, %c0_63], %79 {strides = array<i32>} : memref<8x24xf32, #tpu.memory_space<vmem>>, vector<2x24xf32>,
    %c0_64 = arith.constant 0 : index
    %c0_65 = arith.constant 0 : index
    %84 = vector.load %arg9[%c0_64, %c0_65] : memref<8x24xf32, #tpu.memory_space<vmem>>, vector<8x24xf32>
    %85 = vector.extract_strided_slice %84 {offsets = [0, 0], sizes = [8, 8], strides = [1, 1]} : vector<8x24xf32> to vector<8x8xf32>
    %86 = vector.extract_strided_slice %84 {offsets = [0, 8], sizes = [8, 8], strides = [1, 1]} : vector<8x24xf32> to vector<8x8xf32>
    %87 = vector.extract_strided_slice %84 {offsets = [0, 16], sizes = [8, 8], strides = [1, 1]} : vector<8x24xf32> to vector<8x8xf32>
    %c0_66 = arith.constant 0 : index
    %c0_67 = arith.constant 0 : index
    %88 = vector.load %arg6[%c0_66, %c0_67] : memref<8x128xf32, #tpu.memory_space<vmem>>, vector<8x128xf32>
    %89 = vector.extract_strided_slice %88 {offsets = [0, 0], sizes = [8, 8], strides = [1, 1]} : vector<8x128xf32> to vector<8x8xf32>
    %90 = arith.mulf %85, %89 : vector<8x8xf32>
    %91 = vector.extract_strided_slice %88 {offsets = [0, 24], sizes = [8, 8], strides = [1, 1]} : vector<8x128xf32> to vector<8x8xf32>
    %92 = arith.mulf %86, %91 : vector<8x8xf32>
    %93 = arith.addf %90, %92 : vector<8x8xf32>
    %94 = vector.extract_strided_slice %88 {offsets = [0, 48], sizes = [8, 8], strides = [1, 1]} : vector<8x128xf32> to vector<8x8xf32>
    %95 = arith.mulf %87, %94 : vector<8x8xf32>
    %96 = arith.addf %93, %95 : vector<8x8xf32>
    %97 = vector.extract_strided_slice %88 {offsets = [0, 8], sizes = [8, 8], strides = [1, 1]} : vector<8x128xf32> to vector<8x8xf32>
    %98 = arith.mulf %85, %97 : vector<8x8xf32>
    %99 = vector.extract_strided_slice %88 {offsets = [0, 32], sizes = [8, 8], strides = [1, 1]} : vector<8x128xf32> to vector<8x8xf32>
    %100 = arith.mulf %86, %99 : vector<8x8xf32>
    %101 = arith.addf %98, %100 : vector<8x8xf32>
    %102 = vector.extract_strided_slice %88 {offsets = [0, 56], sizes = [8, 8], strides = [1, 1]} : vector<8x128xf32> to vector<8x8xf32>
    %103 = arith.mulf %87, %102 : vector<8x8xf32>
    %104 = arith.addf %101, %103 : vector<8x8xf32>
    %105 = vector.extract_strided_slice %88 {offsets = [0, 16], sizes = [8, 8], strides = [1, 1]} : vector<8x128xf32> to vector<8x8xf32>
    %106 = arith.mulf %85, %105 : vector<8x8xf32>
    %107 = vector.extract_strided_slice %88 {offsets = [0, 40], sizes = [8, 8], strides = [1, 1]} : vector<8x128xf32> to vector<8x8xf32>
    %108 = arith.mulf %86, %107 : vector<8x8xf32>
    %109 = arith.addf %106, %108 : vector<8x8xf32>
    %110 = vector.extract_strided_slice %88 {offsets = [0, 64], sizes = [8, 8], strides = [1, 1]} : vector<8x128xf32> to vector<8x8xf32>
    %111 = arith.mulf %87, %110 : vector<8x8xf32>
    %112 = arith.addf %109, %111 : vector<8x8xf32>
    %cst_68 = arith.constant 5.000000e+00 : f32
    %113 = vector.broadcast %cst_68 : f32 to vector<8x8xf32>
    %114 = arith.addf %113, %112 : vector<8x8xf32>
    %cst_69 = arith.constant 1.000000e+00 : f32
    %115 = vector.broadcast %cst_69 : f32 to vector<8x8xf32>
    %116 = arith.maximumf %114, %115 : vector<8x8xf32>
    %cst_70 = arith.constant 1.000000e+00 : f32
    %117 = vector.broadcast %cst_70 : f32 to vector<8x8xf32>
    %118 = arith.divf %117, %116 : vector<8x8xf32>
    %119 = arith.mulf %96, %118 : vector<8x8xf32>
    %120 = arith.mulf %104, %118 : vector<8x8xf32>
    %c0_71 = arith.constant 0 : index
    %c0_72 = arith.constant 0 : index
    %121 = vector.load %arg10[%c0_71, %c0_72] : memref<8x16xf32, #tpu.memory_space<vmem>>, vector<8x8xf32>
    tpu.vector_store %arg10[%c0_71, %c0_72], %119 {strides = array<i32>} : memref<8x16xf32, #tpu.memory_space<vmem>>, vector<8x8xf32>,
    %c0_73 = arith.constant 0 : index
    %c8 = arith.constant 8 : index
    %122 = vector.load %arg10[%c0_73, %c8] : memref<8x16xf32, #tpu.memory_space<vmem>>, vector<8x8xf32>
    tpu.vector_store %arg10[%c0_73, %c8], %120 {strides = array<i32>} : memref<8x16xf32, #tpu.memory_space<vmem>>, vector<8x8xf32>,
    %c0_74 = arith.constant 0 : index
    %c0_75 = arith.constant 0 : index
    %123 = vector.load %arg10[%c0_74, %c0_75] : memref<8x16xf32, #tpu.memory_space<vmem>>, vector<8x16xf32>
    %c0_76 = arith.constant 0 : index
    %c0_77 = arith.constant 0 : index
    %124 = vector.load %arg1[%c0_76, %c0_77] : memref<16x128xbf16, #tpu.memory_space<vmem>>, vector<16x128xbf16>
    %125 = arith.truncf %123 : vector<8x16xf32> to vector<8x16xbf16>
    %cst_78 = arith.constant dense<0.000000e+00> : vector<8x128xf32>
    %126 = tpu.matmul %125, %124, %cst_78 {dimension_numbers = #tpu.dot_dimension_numbers<[1], [0], [0], [1], [0, 0, 1, 1], [], []>} : vector<8x16xbf16>, vector<16x128xbf16>, vector<8x128xf32> -> vector<8x128xf32>
    %127 = vector.broadcast %1 : vector<1x128xf32> to vector<8x128xf32>
    %128 = arith.addf %126, %127 : vector<8x128xf32>
    %cst_79 = arith.constant 0.000000e+00 : f32
    %129 = vector.broadcast %cst_79 : f32 to vector<8x128xf32>
    %130 = arith.maximumf %128, %129 : vector<8x128xf32>
    %c0_80 = arith.constant 0 : index
    %c0_81 = arith.constant 0 : index
    %c0_82 = arith.constant 0 : index
    %131 = vector.load %arg2[%c0_80, %c0_81, %c0_82] : memref<6x128x128xbf16, #tpu.memory_space<vmem>>, vector<1x128x128xbf16>
    %132 = vector.shape_cast %131 : vector<1x128x128xbf16> to vector<128x128xbf16>
    %c1_83 = arith.constant 1 : index
    %c0_84 = arith.constant 0 : index
    %c0_85 = arith.constant 0 : index
    %133 = vector.load %arg3[%c1_83, %c0_84, %c0_85] : memref<7x1x128xf32, #tpu.memory_space<vmem>>, vector<1x1x128xf32>
    %134 = vector.shape_cast %133 : vector<1x1x128xf32> to vector<1x128xf32>
    %135 = arith.truncf %130 : vector<8x128xf32> to vector<8x128xbf16>
    %cst_86 = arith.constant dense<0.000000e+00> : vector<8x128xf32>
    %136 = tpu.matmul %135, %132, %cst_86 {dimension_numbers = #tpu.dot_dimension_numbers<[1], [0], [0], [1], [0, 0, 1, 1], [], []>} : vector<8x128xbf16>, vector<128x128xbf16>, vector<8x128xf32> -> vector<8x128xf32>
    %137 = vector.broadcast %134 : vector<1x128xf32> to vector<8x128xf32>
    %138 = arith.addf %136, %137 : vector<8x128xf32>
    %cst_87 = arith.constant 0.000000e+00 : f32
    %139 = vector.broadcast %cst_87 : f32 to vector<8x128xf32>
    %140 = arith.maximumf %138, %139 : vector<8x128xf32>
    %c1_88 = arith.constant 1 : index
    %c0_89 = arith.constant 0 : index
    %c0_90 = arith.constant 0 : index
    %141 = vector.load %arg2[%c1_88, %c0_89, %c0_90] : memref<6x128x128xbf16, #tpu.memory_space<vmem>>, vector<1x128x128xbf16>
    %142 = vector.shape_cast %141 : vector<1x128x128xbf16> to vector<128x128xbf16>
    %c2_91 = arith.constant 2 : index
    %c0_92 = arith.constant 0 : index
    %c0_93 = arith.constant 0 : index
    %143 = vector.load %arg3[%c2_91, %c0_92, %c0_93] : memref<7x1x128xf32, #tpu.memory_space<vmem>>, vector<1x1x128xf32>
    %144 = vector.shape_cast %143 : vector<1x1x128xf32> to vector<1x128xf32>
    %145 = arith.truncf %140 : vector<8x128xf32> to vector<8x128xbf16>
    %cst_94 = arith.constant dense<0.000000e+00> : vector<8x128xf32>
    %146 = tpu.matmul %145, %142, %cst_94 {dimension_numbers = #tpu.dot_dimension_numbers<[1], [0], [0], [1], [0, 0, 1, 1], [], []>} : vector<8x128xbf16>, vector<128x128xbf16>, vector<8x128xf32> -> vector<8x128xf32>
    %147 = vector.broadcast %144 : vector<1x128xf32> to vector<8x128xf32>
    %148 = arith.addf %146, %147 : vector<8x128xf32>
    %cst_95 = arith.constant 0.000000e+00 : f32
    %149 = vector.broadcast %cst_95 : f32 to vector<8x128xf32>
    %150 = arith.maximumf %148, %149 : vector<8x128xf32>
    %c2_96 = arith.constant 2 : index
    %c0_97 = arith.constant 0 : index
    %c0_98 = arith.constant 0 : index
    %151 = vector.load %arg2[%c2_96, %c0_97, %c0_98] : memref<6x128x128xbf16, #tpu.memory_space<vmem>>, vector<1x128x128xbf16>
    %152 = vector.shape_cast %151 : vector<1x128x128xbf16> to vector<128x128xbf16>
    %c3_99 = arith.constant 3 : index
    %c0_100 = arith.constant 0 : index
    %c0_101 = arith.constant 0 : index
    %153 = vector.load %arg3[%c3_99, %c0_100, %c0_101] : memref<7x1x128xf32, #tpu.memory_space<vmem>>, vector<1x1x128xf32>
    %154 = vector.shape_cast %153 : vector<1x1x128xf32> to vector<1x128xf32>
    %155 = arith.truncf %150 : vector<8x128xf32> to vector<8x128xbf16>
    %cst_102 = arith.constant dense<0.000000e+00> : vector<8x128xf32>
    %156 = tpu.matmul %155, %152, %cst_102 {dimension_numbers = #tpu.dot_dimension_numbers<[1], [0], [0], [1], [0, 0, 1, 1], [], []>} : vector<8x128xbf16>, vector<128x128xbf16>, vector<8x128xf32> -> vector<8x128xf32>
    %157 = vector.broadcast %154 : vector<1x128xf32> to vector<8x128xf32>
    %158 = arith.addf %156, %157 : vector<8x128xf32>
    %159 = arith.addf %158, %130 : vector<8x128xf32>
    %cst_103 = arith.constant 0.000000e+00 : f32
    %160 = vector.broadcast %cst_103 : f32 to vector<8x128xf32>
    %161 = arith.maximumf %159, %160 : vector<8x128xf32>
    %c3_104 = arith.constant 3 : index
    %c0_105 = arith.constant 0 : index
    %c0_106 = arith.constant 0 : index
    %162 = vector.load %arg2[%c3_104, %c0_105, %c0_106] : memref<6x128x128xbf16, #tpu.memory_space<vmem>>, vector<1x128x128xbf16>
    %163 = vector.shape_cast %162 : vector<1x128x128xbf16> to vector<128x128xbf16>
    %c4_107 = arith.constant 4 : index
    %c0_108 = arith.constant 0 : index
    %c0_109 = arith.constant 0 : index
    %164 = vector.load %arg3[%c4_107, %c0_108, %c0_109] : memref<7x1x128xf32, #tpu.memory_space<vmem>>, vector<1x1x128xf32>
    %165 = vector.shape_cast %164 : vector<1x1x128xf32> to vector<1x128xf32>
    %166 = arith.truncf %161 : vector<8x128xf32> to vector<8x128xbf16>
    %cst_110 = arith.constant dense<0.000000e+00> : vector<8x128xf32>
    %167 = tpu.matmul %166, %163, %cst_110 {dimension_numbers = #tpu.dot_dimension_numbers<[1], [0], [0], [1], [0, 0, 1, 1], [], []>} : vector<8x128xbf16>, vector<128x128xbf16>, vector<8x128xf32> -> vector<8x128xf32>
    %168 = vector.broadcast %165 : vector<1x128xf32> to vector<8x128xf32>
    %169 = arith.addf %167, %168 : vector<8x128xf32>
    %cst_111 = arith.constant 0.000000e+00 : f32
    %170 = vector.broadcast %cst_111 : f32 to vector<8x128xf32>
    %171 = arith.maximumf %169, %170 : vector<8x128xf32>
    %c4_112 = arith.constant 4 : index
    %c0_113 = arith.constant 0 : index
    %c0_114 = arith.constant 0 : index
    %172 = vector.load %arg2[%c4_112, %c0_113, %c0_114] : memref<6x128x128xbf16, #tpu.memory_space<vmem>>, vector<1x128x128xbf16>
    %173 = vector.shape_cast %172 : vector<1x128x128xbf16> to vector<128x128xbf16>
    %c5_115 = arith.constant 5 : index
    %c0_116 = arith.constant 0 : index
    %c0_117 = arith.constant 0 : index
    %174 = vector.load %arg3[%c5_115, %c0_116, %c0_117] : memref<7x1x128xf32, #tpu.memory_space<vmem>>, vector<1x1x128xf32>
    %175 = vector.shape_cast %174 : vector<1x1x128xf32> to vector<1x128xf32>
    %176 = arith.truncf %171 : vector<8x128xf32> to vector<8x128xbf16>
    %cst_118 = arith.constant dense<0.000000e+00> : vector<8x128xf32>
    %177 = tpu.matmul %176, %173, %cst_118 {dimension_numbers = #tpu.dot_dimension_numbers<[1], [0], [0], [1], [0, 0, 1, 1], [], []>} : vector<8x128xbf16>, vector<128x128xbf16>, vector<8x128xf32> -> vector<8x128xf32>
    %178 = vector.broadcast %175 : vector<1x128xf32> to vector<8x128xf32>
    %179 = arith.addf %177, %178 : vector<8x128xf32>
    %cst_119 = arith.constant 0.000000e+00 : f32
    %180 = vector.broadcast %cst_119 : f32 to vector<8x128xf32>
    %181 = arith.maximumf %179, %180 : vector<8x128xf32>
    %c5_120 = arith.constant 5 : index
    %c0_121 = arith.constant 0 : index
    %c0_122 = arith.constant 0 : index
    %182 = vector.load %arg2[%c5_120, %c0_121, %c0_122] : memref<6x128x128xbf16, #tpu.memory_space<vmem>>, vector<1x128x128xbf16>
    %183 = vector.shape_cast %182 : vector<1x128x128xbf16> to vector<128x128xbf16>
    %c6_123 = arith.constant 6 : index
    %c0_124 = arith.constant 0 : index
    %c0_125 = arith.constant 0 : index
    %184 = vector.load %arg3[%c6_123, %c0_124, %c0_125] : memref<7x1x128xf32, #tpu.memory_space<vmem>>, vector<1x1x128xf32>
    %185 = vector.shape_cast %184 : vector<1x1x128xf32> to vector<1x128xf32>
    %186 = arith.truncf %181 : vector<8x128xf32> to vector<8x128xbf16>
    %cst_126 = arith.constant dense<0.000000e+00> : vector<8x128xf32>
    %187 = tpu.matmul %186, %183, %cst_126 {dimension_numbers = #tpu.dot_dimension_numbers<[1], [0], [0], [1], [0, 0, 1, 1], [], []>} : vector<8x128xbf16>, vector<128x128xbf16>, vector<8x128xf32> -> vector<8x128xf32>
    %188 = vector.broadcast %185 : vector<1x128xf32> to vector<8x128xf32>
    %189 = arith.addf %187, %188 : vector<8x128xf32>
    %190 = arith.addf %189, %161 : vector<8x128xf32>
    %cst_127 = arith.constant 0.000000e+00 : f32
    %191 = vector.broadcast %cst_127 : f32 to vector<8x128xf32>
    %192 = arith.maximumf %190, %191 : vector<8x128xf32>
    %c0_128 = arith.constant 0 : index
    %c0_129 = arith.constant 0 : index
    %193 = vector.load %arg4[%c0_128, %c0_129] : memref<128x128xbf16, #tpu.memory_space<vmem>>, vector<128x128xbf16>
    %c0_130 = arith.constant 0 : index
    %c0_131 = arith.constant 0 : index
    %194 = vector.load %arg5[%c0_130, %c0_131] : memref<1x128xf32, #tpu.memory_space<vmem>>, vector<1x128xf32>
    %195 = arith.truncf %192 : vector<8x128xf32> to vector<8x128xbf16>
    %cst_132 = arith.constant dense<0.000000e+00> : vector<8x128xf32>
    %196 = tpu.matmul %195, %193, %cst_132 {dimension_numbers = #tpu.dot_dimension_numbers<[1], [0], [0], [1], [0, 0, 1, 1], [], []>} : vector<8x128xbf16>, vector<128x128xbf16>, vector<8x128xf32> -> vector<8x128xf32>
    %197 = vector.broadcast %194 : vector<1x128xf32> to vector<8x128xf32>
    %198 = arith.addf %196, %197 : vector<8x128xf32>
    %199 = vector.extract_strided_slice %198 {offsets = [0, 0], sizes = [8, 8], strides = [1, 1]} : vector<8x128xf32> to vector<8x8xf32>
    %200 = vector.extract_strided_slice %198 {offsets = [0, 8], sizes = [8, 8], strides = [1, 1]} : vector<8x128xf32> to vector<8x8xf32>
    %201 = vector.extract_strided_slice %198 {offsets = [0, 16], sizes = [8, 8], strides = [1, 1]} : vector<8x128xf32> to vector<8x8xf32>
    %202 = arith.subf %199, %85 : vector<8x8xf32>
    %203 = arith.mulf %202, %202 : vector<8x8xf32>
    %204 = arith.subf %200, %86 : vector<8x8xf32>
    %205 = arith.mulf %204, %204 : vector<8x8xf32>
    %206 = arith.addf %203, %205 : vector<8x8xf32>
    %207 = arith.subf %201, %87 : vector<8x8xf32>
    %208 = arith.mulf %207, %207 : vector<8x8xf32>
    %209 = arith.addf %206, %208 : vector<8x8xf32>
    %210 = math.sqrt %209 : vector<8x8xf32>
    %211 = vector.shape_cast %210 : vector<8x8xf32> to vector<1x8x8xf32>
    %cst_133 = arith.constant dense<0.000000e+00> : vector<1xf32>
    %212 = vector.multi_reduction <add>, %211, %cst_133 [1, 2] : vector<1x8x8xf32> to vector<1xf32>
    %213 = vector.shape_cast %212 : vector<1xf32> to vector<1x1x1xf32>
    %214 = vector.extract %213[0, 0, 0] : f32 from vector<1x1x1xf32>
    %215 = vector.broadcast %214 : f32 to vector<1x1xf32>
    %cst_134 = arith.constant 6.400000e+01 : f32
    %216 = vector.broadcast %cst_134 : f32 to vector<1x1xf32>
    %217 = arith.divf %215, %216 : vector<1x1xf32>
    %218 = vector.shape_cast %217 : vector<1x1xf32> to vector<1x1xf32>
    %219 = vector.broadcast %218 : vector<1x1xf32> to vector<1x128xf32>
    %c0_135 = arith.constant 0 : index
    %c0_136 = arith.constant 0 : index
    %220 = vector.load %arg8[%c0_135, %c0_136] : memref<1x128xf32, #tpu.memory_space<vmem>>, vector<1x128xf32>
    tpu.vector_store %arg8[%c0_135, %c0_136], %219 {strides = array<i32>} : memref<1x128xf32, #tpu.memory_space<vmem>>, vector<1x128xf32>,
    return
  }
}

</mosaic_0001>

<llo_original>
// kernel: teacher_forward.1
$region0: #{teacher_forward.1}
  #allocation0 [shape = 'u32[]', space=smem, size = 0x4, offset = 0x4, fixed_abs, tag = 'smem constant byte address 0x4 - core index']
  #allocation1 [shape = 'u32[72,128]{1,0:T(1,128)}', space=vmem, size = 0x9000, scoped, tag = 'internal scratch']
  #allocation2 [shape = 'f32[8,24]{1,0:T(8,128)}', space=vmem, size = 0x1000, scoped, tag = 'scratch operand']
  #allocation3 [shape = 'f32[8,16]{1,0:T(8,128)}', space=vmem, size = 0x1000, scoped, tag = 'scratch operand']
  %s0 = inlined_call_operand.vmem [shape: f32[2,16], index: 0, kind: input, shape index: {}]
  %s1 = inlined_call_operand.vmem [shape: bf16[16,128], index: 1, kind: input, shape index: {}]
  %s2 = inlined_call_operand.vmem [shape: bf16[6,128,128], index: 2, kind: input, shape index: {}]
  %s3 = inlined_call_operand.vmem [shape: f32[7,1,128], index: 3, kind: input, shape index: {}]
  %s4 = inlined_call_operand.vmem [shape: bf16[128,128], index: 4, kind: input, shape index: {}]
  %s5 = inlined_call_operand.vmem [shape: f32[1,128], index: 5, kind: input, shape index: {}]
  %s6 = inlined_call_operand.vmem [shape: f32[8,128], index: 6, kind: input, shape index: {}]
  %s7 = inlined_call_operand.vmem [shape: f32[2,128], index: 7, kind: output, shape index: {0}]
  %s8 = inlined_call_operand.hbm [shape: f32[1,128], index: 8, kind: output, shape index: {1}]
  %9 = xla_tuple %s7, %s8
  %s10 = sld [smem:[#allocation0]]
  $region46: #{teacher_forward.1} parent=0
    _
  %s12 = ssub.s32 1, %s10
  %s13 = scalar_select 0, %s12, %s10
  $region1: #{teacher_forward.1} parent=0
    #allocation4 [shape = 'u8[512]{0}', space=vmem, size = 0x400, scoped, tag = 'output window, operand 1, single buffered']
    #allocation5 [shape = 's32[1]{0}', space=sflag, size = 0x4, scoped, tag = 'scoped memory for teacher_forward.1']
    %14 = vsyncpa [#allocation5], 0
    // Predicated region
    $region2: #{teacher_forward.1} parent=1 // pred_check
      _
    $region3: #{teacher_forward.1} parent=1 // pred_check_branch
      %16 = sbr.rel (0) target = $region5
    $region4: #{teacher_forward.1} parent=1 // pred_region
      _
    $region5: #{teacher_forward.1} parent=1 // pred_fallthru
      _
    // Predicated region
    $region6: #{teacher_forward.1} parent=1 // pred_check
      _
    $region7: #{teacher_forward.1} parent=1 // pred_check_branch
      %18 = sbr.rel (0) target = $region9
    $region8: #{teacher_forward.1} parent=1 // pred_region
      _
    $region9: #{teacher_forward.1} parent=1 // pred_fallthru
      _
    // Predicated region
    $region10: #{teacher_forward.1} parent=1 // pred_check
      _
    $region11: #{teacher_forward.1} parent=1 // pred_check_branch
      %20 = sbr.rel (0) target = $region13
    $region12: #{teacher_forward.1} parent=1 // pred_region
      _
    $region13: #{teacher_forward.1} parent=1 // pred_fallthru
      _
    // Predicated region
    $region14: #{teacher_forward.1} parent=1 // pred_check
      _
    $region15: #{teacher_forward.1} parent=1 // pred_check_branch
      %22 = sbr.rel (0) target = $region17
    $region16: #{teacher_forward.1} parent=1 // pred_region
      _
    $region17: #{teacher_forward.1} parent=1 // pred_fallthru
      _
    // Predicated region
    $region18: #{teacher_forward.1} parent=1 // pred_check
      _
    $region19: #{teacher_forward.1} parent=1 // pred_check_branch
      %24 = sbr.rel (0) target = $region21
    $region20: #{teacher_forward.1} parent=1 // pred_region
      _
    $region21: #{teacher_forward.1} parent=1 // pred_fallthru
      _
    // Predicated region
    $region22: #{teacher_forward.1} parent=1 // pred_check
      _
    $region23: #{teacher_forward.1} parent=1 // pred_check_branch
      %26 = sbr.rel (0) target = $region25
    $region24: #{teacher_forward.1} parent=1 // pred_region
      _
    $region25: #{teacher_forward.1} parent=1 // pred_fallthru
      _
    // Predicated region
    $region26: #{teacher_forward.1} parent=1 // pred_check
      _
    $region27: #{teacher_forward.1} parent=1 // pred_check_branch
      %28 = sbr.rel (0) target = $region29
    $region28: #{teacher_forward.1} parent=1 // pred_region
      _
    $region29: #{teacher_forward.1} parent=1 // pred_fallthru
      _
    %v30 = vld [vmem:[%s3] sm:$0x1]
    %v31 = vld [vmem:[%s0] sm:$0x3]
    %v32 = vld [vmem:[%s1] sm:$0xf]
    %v33 = vld [vmem:[%s1 + $0x4] sm:$0xf]
    %v34 = vpack.c.bf16 %v31, %v31
    %v36 = vperm.slane %v30, 0
    %v40 = vunpack.c.l.b16 %v32
    %v41 = vunpack.c.l.b16 %v33
    %v42 = vpack.c.b16 %v41, %v40
    %vm44 = vcmask 130048
    %v46 = vsel %vm44, %v34, 0
    %48 = vmatpush.bf16.msra.mxu0 0
    %49 = vmatpush.bf16.msra.mxu0 0
    %50 = vmatpush.bf16.msra.mxu0 0
    %51 = vmatpush.bf16.msra.mxu0 0
    %52 = vmatpush.bf16.msra.mxu0 0
    %53 = vmatpush.bf16.msra.mxu0 0
    %54 = vmatpush.bf16.msra.mxu0 0
    %55 = vmatpush.bf16.msra.mxu0 %v42
    %56 = vmatmul.bf16.gmra.mxu0 %v46
    %v57 = vpop.f32.mrf.mxu0
    %v58 = vadd.f32 %v36, %v57
    %v59 = vpop.f32.mrf.mxu0
    %60 = vdwg.mxu0
    %v61 = vmax.f32 %v58, 0.0
    %v62 = vld [vmem:[%s2] sm:$0xf]
    %v63 = vld [vmem:[%s2 + $0x4] sm:$0xf]
    %v64 = vld [vmem:[%s2 + $0x8] sm:$0xf]
    %v65 = vld [vmem:[%s2 + $0xc] sm:$0xf]
    %v66 = vld [vmem:[%s2 + $0x10] sm:$0xf]
    %v67 = vld [vmem:[%s2 + $0x14] sm:$0xf]
    %v68 = vld [vmem:[%s2 + $0x18] sm:$0xf]
    %v69 = vld [vmem:[%s2 + $0x1c] sm:$0xf]
    %v70 = vld [vmem:[%s2 + $0x20] sm:$0xf]
    %v71 = vld [vmem:[%s2 + $0x24] sm:$0xf]
    %v72 = vld [vmem:[%s2 + $0x28] sm:$0xf]
    %v73 = vld [vmem:[%s2 + $0x2c] sm:$0xf]
    %v74 = vld [vmem:[%s2 + $0x30] sm:$0xf]
    %v75 = vld [vmem:[%s2 + $0x34] sm:$0xf]
    %v76 = vld [vmem:[%s2 + $0x38] sm:$0xf]
    %v77 = vld [vmem:[%s2 + $0x3c] sm:$0xf]
    %s78 = scalar_lea.vmem %s3, 1
    %v79 = vld [vmem:[%s78] sm:$0x1]
    %v80 = vpack.c.bf16 %v61, %v61
    %v82 = vperm.slane %v79, 0
    %v100 = vunpack.c.l.b16 %v62
    %v101 = vunpack.c.l.b16 %v63
    %v102 = vunpack.c.l.b16 %v64
    %v103 = vunpack.c.l.b16 %v65
    %v104 = vunpack.c.l.b16 %v66
    %v105 = vunpack.c.l.b16 %v67
    %v106 = vunpack.c.l.b16 %v68
    %v107 = vunpack.c.l.b16 %v69
    %v108 = vunpack.c.l.b16 %v70
    %v109 = vunpack.c.l.b16 %v71
    %v110 = vunpack.c.l.b16 %v72
    %v111 = vunpack.c.l.b16 %v73
    %v112 = vunpack.c.l.b16 %v74
    %v113 = vunpack.c.l.b16 %v75
    %v114 = vunpack.c.l.b16 %v76
    %v115 = vunpack.c.l.b16 %v77
    %v116 = vpack.c.b16 %v101, %v100
    %v117 = vpack.c.b16 %v103, %v102
    %v118 = vpack.c.b16 %v105, %v104
    %v119 = vpack.c.b16 %v107, %v106
    %v120 = vpack.c.b16 %v109, %v108
    %v121 = vpack.c.b16 %v111, %v110
    %v122 = vpack.c.b16 %v113, %v112
    %v123 = vpack.c.b16 %v115, %v114
    %132 = vmatpush.bf16.msra.mxu0 %v123
    %133 = vmatpush.bf16.msra.mxu0 %v122
    %134 = vmatpush.bf16.msra.mxu0 %v121
    %135 = vmatpush.bf16.msra.mxu0 %v120
    %136 = vmatpush.bf16.msra.mxu0 %v119
    %137 = vmatpush.bf16.msra.mxu0 %v118
    %138 = vmatpush.bf16.msra.mxu0 %v117
    %139 = vmatpush.bf16.msra.mxu0 %v116
    %140 = vmatmul.bf16.gmra.mxu0 %v80
    %v141 = vpop.f32.mrf.mxu0
    %v142 = vadd.f32 %v82, %v141
    %v143 = vpop.f32.mrf.mxu0
    %144 = vdwg.mxu0
    %v145 = vmax.f32 %v142, 0.0
    %s146 = scalar_lea.vmem %s2, 64
    %v147 = vld [vmem:[%s146] sm:$0xf]
    %v148 = vld [vmem:[%s146 + $0x4] sm:$0xf]
    %v149 = vld [vmem:[%s146 + $0x8] sm:$0xf]
    %v150 = vld [vmem:[%s146 + $0xc] sm:$0xf]
    %v151 = vld [vmem:[%s146 + $0x10] sm:$0xf]
    %v152 = vld [vmem:[%s146 + $0x14] sm:$0xf]
    %v153 = vld [vmem:[%s146 + $0x18] sm:$0xf]
    %v154 = vld [vmem:[%s146 + $0x1c] sm:$0xf]
    %v155 = vld [vmem:[%s146 + $0x20] sm:$0xf]
    %v156 = vld [vmem:[%s146 + $0x24] sm:$0xf]
    %v157 = vld [vmem:[%s146 + $0x28] sm:$0xf]
    %v158 = vld [vmem:[%s146 + $0x2c] sm:$0xf]
    %v159 = vld [vmem:[%s146 + $0x30] sm:$0xf]
    %v160 = vld [vmem:[%s146 + $0x34] sm:$0xf]
    %v161 = vld [vmem:[%s146 + $0x38] sm:$0xf]
    %v162 = vld [vmem:[%s146 + $0x3c] sm:$0xf]
    %s163 = scalar_lea.vmem %s3, 2
    %v164 = vld [vmem:[%s163] sm:$0x1]
    %v165 = vpack.c.bf16 %v145, %v145
    %v167 = vperm.slane %v164, 0
    %v185 = vunpack.c.l.b16 %v147
    %v186 = vunpack.c.l.b16 %v148
    %v187 = vunpack.c.l.b16 %v149
    %v188 = vunpack.c.l.b16 %v150
    %v189 = vunpack.c.l.b16 %v151
    %v190 = vunpack.c.l.b16 %v152
    %v191 = vunpack.c.l.b16 %v153
    %v192 = vunpack.c.l.b16 %v154
    %v193 = vunpack.c.l.b16 %v155
    %v194 = vunpack.c.l.b16 %v156
    %v195 = vunpack.c.l.b16 %v157
    %v196 = vunpack.c.l.b16 %v158
    %v197 = vunpack.c.l.b16 %v159
    %v198 = vunpack.c.l.b16 %v160
    %v199 = vunpack.c.l.b16 %v161
    %v200 = vunpack.c.l.b16 %v162
    %v201 = vpack.c.b16 %v186, %v185
    %v202 = vpack.c.b16 %v188, %v187
    %v203 = vpack.c.b16 %v190, %v189
    %v204 = vpack.c.b16 %v192, %v191
    %v205 = vpack.c.b16 %v194, %v193
    %v206 = vpack.c.b16 %v196, %v195
    %v207 = vpack.c.b16 %v198, %v197
    %v208 = vpack.c.b16 %v200, %v199
    %217 = vmatpush.bf16.msra.mxu0 %v208
    %218 = vmatpush.bf16.msra.mxu0 %v207
    %219 = vmatpush.bf16.msra.mxu0 %v206
    %220 = vmatpush.bf16.msra.mxu0 %v205
    %221 = vmatpush.bf16.msra.mxu0 %v204
    %222 = vmatpush.bf16.msra.mxu0 %v203
    %223 = vmatpush.bf16.msra.mxu0 %v202
    %224 = vmatpush.bf16.msra.mxu0 %v201
    %225 = vmatmul.bf16.gmra.mxu0 %v165
    %v226 = vpop.f32.mrf.mxu0
    %v227 = vadd.f32 %v167, %v226
    %v228 = vpop.f32.mrf.mxu0
    %229 = vdwg.mxu0
    %v230 = vmax.f32 %v227, 0.0
    %s231 = scalar_lea.vmem %s2, 128
    %v232 = vld [vmem:[%s231] sm:$0xf]
    %v233 = vld [vmem:[%s231 + $0x4] sm:$0xf]
    %v234 = vld [vmem:[%s231 + $0x8] sm:$0xf]
    %v235 = vld [vmem:[%s231 + $0xc] sm:$0xf]
    %v236 = vld [vmem:[%s231 + $0x10] sm:$0xf]
    %v237 = vld [vmem:[%s231 + $0x14] sm:$0xf]
    %v238 = vld [vmem:[%s231 + $0x18] sm:$0xf]
    %v239 = vld [vmem:[%s231 + $0x1c] sm:$0xf]
    %v240 = vld [vmem:[%s231 + $0x20] sm:$0xf]
    %v241 = vld [vmem:[%s231 + $0x24] sm:$0xf]
    %v242 = vld [vmem:[%s231 + $0x28] sm:$0xf]
    %v243 = vld [vmem:[%s231 + $0x2c] sm:$0xf]
    %v244 = vld [vmem:[%s231 + $0x30] sm:$0xf]
    %v245 = vld [vmem:[%s231 + $0x34] sm:$0xf]
    %v246 = vld [vmem:[%s231 + $0x38] sm:$0xf]
    %v247 = vld [vmem:[%s231 + $0x3c] sm:$0xf]
    %s248 = scalar_lea.vmem %s3, 3
    %v249 = vld [vmem:[%s248] sm:$0x1]
    %v250 = vpack.c.bf16 %v230, %v230
    %v252 = vperm.slane %v249, 0
    %v270 = vunpack.c.l.b16 %v232
    %v271 = vunpack.c.l.b16 %v233
    %v272 = vunpack.c.l.b16 %v234
    %v273 = vunpack.c.l.b16 %v235
    %v274 = vunpack.c.l.b16 %v236
    %v275 = vunpack.c.l.b16 %v237
    %v276 = vunpack.c.l.b16 %v238
    %v277 = vunpack.c.l.b16 %v239
    %v278 = vunpack.c.l.b16 %v240
    %v279 = vunpack.c.l.b16 %v241
    %v280 = vunpack.c.l.b16 %v242
    %v281 = vunpack.c.l.b16 %v243
    %v282 = vunpack.c.l.b16 %v244
    %v283 = vunpack.c.l.b16 %v245
    %v284 = vunpack.c.l.b16 %v246
    %v285 = vunpack.c.l.b16 %v247
    %v286 = vpack.c.b16 %v271, %v270
    %v287 = vpack.c.b16 %v273, %v272
    %v288 = vpack.c.b16 %v275, %v274
    %v289 = vpack.c.b16 %v277, %v276
    %v290 = vpack.c.b16 %v279, %v278
    %v291 = vpack.c.b16 %v281, %v280
    %v292 = vpack.c.b16 %v283, %v282
    %v293 = vpack.c.b16 %v285, %v284
    %302 = vmatpush.bf16.msra.mxu0 %v293
    %303 = vmatpush.bf16.msra.mxu0 %v292
    %304 = vmatpush.bf16.msra.mxu0 %v291
    %305 = vmatpush.bf16.msra.mxu0 %v290
    %306 = vmatpush.bf16.msra.mxu0 %v289
    %307 = vmatpush.bf16.msra.mxu0 %v288
    %308 = vmatpush.bf16.msra.mxu0 %v287
    %309 = vmatpush.bf16.msra.mxu0 %v286
    %310 = vmatmul.bf16.gmra.mxu0 %v250
    %v311 = vpop.f32.mrf.mxu0
    %v312 = vadd.f32 %v252, %v311
    %v313 = vpop.f32.mrf.mxu0
    %314 = vdwg.mxu0
    %v315 = vadd.f32 %v312, %v61
    %v316 = vmax.f32 %v315, 0.0
    %s317 = scalar_lea.vmem %s2, 192
    %v318 = vld [vmem:[%s317] sm:$0xf]
    %v319 = vld [vmem:[%s317 + $0x4] sm:$0xf]
    %v320 = vld [vmem:[%s317 + $0x8] sm:$0xf]
    %v321 = vld [vmem:[%s317 + $0xc] sm:$0xf]
    %v322 = vld [vmem:[%s317 + $0x10] sm:$0xf]
    %v323 = vld [vmem:[%s317 + $0x14] sm:$0xf]
    %v324 = vld [vmem:[%s317 + $0x18] sm:$0xf]
    %v325 = vld [vmem:[%s317 + $0x1c] sm:$0xf]
    %v326 = vld [vmem:[%s317 + $0x20] sm:$0xf]
    %v327 = vld [vmem:[%s317 + $0x24] sm:$0xf]
    %v328 = vld [vmem:[%s317 + $0x28] sm:$0xf]
    %v329 = vld [vmem:[%s317 + $0x2c] sm:$0xf]
    %v330 = vld [vmem:[%s317 + $0x30] sm:$0xf]
    %v331 = vld [vmem:[%s317 + $0x34] sm:$0xf]
    %v332 = vld [vmem:[%s317 + $0x38] sm:$0xf]
    %v333 = vld [vmem:[%s317 + $0x3c] sm:$0xf]
    %s334 = scalar_lea.vmem %s3, 4
    %v335 = vld [vmem:[%s334] sm:$0x1]
    %v336 = vpack.c.bf16 %v316, %v316
    %v338 = vperm.slane %v335, 0
    %v356 = vunpack.c.l.b16 %v318
    %v357 = vunpack.c.l.b16 %v319
    %v358 = vunpack.c.l.b16 %v320
    %v359 = vunpack.c.l.b16 %v321
    %v360 = vunpack.c.l.b16 %v322
    %v361 = vunpack.c.l.b16 %v323
    %v362 = vunpack.c.l.b16 %v324
    %v363 = vunpack.c.l.b16 %v325
    %v364 = vunpack.c.l.b16 %v326
    %v365 = vunpack.c.l.b16 %v327
    %v366 = vunpack.c.l.b16 %v328
    %v367 = vunpack.c.l.b16 %v329
    %v368 = vunpack.c.l.b16 %v330
    %v369 = vunpack.c.l.b16 %v331
    %v370 = vunpack.c.l.b16 %v332
    %v371 = vunpack.c.l.b16 %v333
    %v372 = vpack.c.b16 %v357, %v356
    %v373 = vpack.c.b16 %v359, %v358
    %v374 = vpack.c.b16 %v361, %v360
    %v375 = vpack.c.b16 %v363, %v362
    %v376 = vpack.c.b16 %v365, %v364
    %v377 = vpack.c.b16 %v367, %v366
    %v378 = vpack.c.b16 %v369, %v368
    %v379 = vpack.c.b16 %v371, %v370
    %388 = vmatpush.bf16.msra.mxu0 %v379
    %389 = vmatpush.bf16.msra.mxu0 %v378
    %390 = vmatpush.bf16.msra.mxu0 %v377
    %391 = vmatpush.bf16.msra.mxu0 %v376
    %392 = vmatpush.bf16.msra.mxu0 %v375
    %393 = vmatpush.bf16.msra.mxu0 %v374
    %394 = vmatpush.bf16.msra.mxu0 %v373
    %395 = vmatpush.bf16.msra.mxu0 %v372
    %396 = vmatmul.bf16.gmra.mxu0 %v336
    %v397 = vpop.f32.mrf.mxu0
    %v398 = vadd.f32 %v338, %v397
    %v399 = vpop.f32.mrf.mxu0
    %400 = vdwg.mxu0
    %v401 = vmax.f32 %v398, 0.0
    %s402 = scalar_lea.vmem %s2, 256
    %v403 = vld [vmem:[%s402] sm:$0xf]
    %v404 = vld [vmem:[%s402 + $0x4] sm:$0xf]
    %v405 = vld [vmem:[%s402 + $0x8] sm:$0xf]
    %v406 = vld [vmem:[%s402 + $0xc] sm:$0xf]
    %v407 = vld [vmem:[%s402 + $0x10] sm:$0xf]
    %v408 = vld [vmem:[%s402 + $0x14] sm:$0xf]
    %v409 = vld [vmem:[%s402 + $0x18] sm:$0xf]
    %v410 = vld [vmem:[%s402 + $0x1c] sm:$0xf]
    %v411 = vld [vmem:[%s402 + $0x20] sm:$0xf]
    %v412 = vld [vmem:[%s402 + $0x24] sm:$0xf]
    %v413 = vld [vmem:[%s402 + $0x28] sm:$0xf]
    %v414 = vld [vmem:[%s402 + $0x2c] sm:$0xf]
    %v415 = vld [vmem:[%s402 + $0x30] sm:$0xf]
    %v416 = vld [vmem:[%s402 + $0x34] sm:$0xf]
    %v417 = vld [vmem:[%s402 + $0x38] sm:$0xf]
    %v418 = vld [vmem:[%s402 + $0x3c] sm:$0xf]
    %s419 = scalar_lea.vmem %s3, 5
    %v420 = vld [vmem:[%s419] sm:$0x1]
    %v421 = vpack.c.bf16 %v401, %v401
    %v423 = vperm.slane %v420, 0
    %v441 = vunpack.c.l.b16 %v403
    %v442 = vunpack.c.l.b16 %v404
    %v443 = vunpack.c.l.b16 %v405
    %v444 = vunpack.c.l.b16 %v406
    %v445 = vunpack.c.l.b16 %v407
    %v446 = vunpack.c.l.b16 %v408
    %v447 = vunpack.c.l.b16 %v409
    %v448 = vunpack.c.l.b16 %v410
    %v449 = vunpack.c.l.b16 %v411
    %v450 = vunpack.c.l.b16 %v412
    %v451 = vunpack.c.l.b16 %v413
    %v452 = vunpack.c.l.b16 %v414
    %v453 = vunpack.c.l.b16 %v415
    %v454 = vunpack.c.l.b16 %v416
    %v455 = vunpack.c.l.b16 %v417
    %v456 = vunpack.c.l.b16 %v418
    %v457 = vpack.c.b16 %v442, %v441
    %v458 = vpack.c.b16 %v444, %v443
    %v459 = vpack.c.b16 %v446, %v445
    %v460 = vpack.c.b16 %v448, %v447
    %v461 = vpack.c.b16 %v450, %v449
    %v462 = vpack.c.b16 %v452, %v451
    %v463 = vpack.c.b16 %v454, %v453
    %v464 = vpack.c.b16 %v456, %v455
    %473 = vmatpush.bf16.msra.mxu0 %v464
    %474 = vmatpush.bf16.msra.mxu0 %v463
    %475 = vmatpush.bf16.msra.mxu0 %v462
    %476 = vmatpush.bf16.msra.mxu0 %v461
    %477 = vmatpush.bf16.msra.mxu0 %v460
    %478 = vmatpush.bf16.msra.mxu0 %v459
    %479 = vmatpush.bf16.msra.mxu0 %v458
    %480 = vmatpush.bf16.msra.mxu0 %v457
    %481 = vmatmul.bf16.gmra.mxu0 %v421
    %v482 = vpop.f32.mrf.mxu0
    %v483 = vadd.f32 %v423, %v482
    %v484 = vpop.f32.mrf.mxu0
    %485 = vdwg.mxu0
    %v486 = vmax.f32 %v483, 0.0
    %s487 = scalar_lea.vmem %s2, 320
    %v488 = vld [vmem:[%s487] sm:$0xf]
    %v489 = vld [vmem:[%s487 + $0x4] sm:$0xf]
    %v490 = vld [vmem:[%s487 + $0x8] sm:$0xf]
    %v491 = vld [vmem:[%s487 + $0xc] sm:$0xf]
    %v492 = vld [vmem:[%s487 + $0x10] sm:$0xf]
    %v493 = vld [vmem:[%s487 + $0x14] sm:$0xf]
    %v494 = vld [vmem:[%s487 + $0x18] sm:$0xf]
    %v495 = vld [vmem:[%s487 + $0x1c] sm:$0xf]
    %v496 = vld [vmem:[%s487 + $0x20] sm:$0xf]
    %v497 = vld [vmem:[%s487 + $0x24] sm:$0xf]
    %v498 = vld [vmem:[%s487 + $0x28] sm:$0xf]
    %v499 = vld [vmem:[%s487 + $0x2c] sm:$0xf]
    %v500 = vld [vmem:[%s487 + $0x30] sm:$0xf]
    %v501 = vld [vmem:[%s487 + $0x34] sm:$0xf]
    %v502 = vld [vmem:[%s487 + $0x38] sm:$0xf]
    %v503 = vld [vmem:[%s487 + $0x3c] sm:$0xf]
    %s504 = scalar_lea.vmem %s3, 6
    %v505 = vld [vmem:[%s504] sm:$0x1]
    %v506 = vpack.c.bf16 %v486, %v486
    %v508 = vperm.slane %v505, 0
    %v526 = vunpack.c.l.b16 %v488
    %v527 = vunpack.c.l.b16 %v489
    %v528 = vunpack.c.l.b16 %v490
    %v529 = vunpack.c.l.b16 %v491
    %v530 = vunpack.c.l.b16 %v492
    %v531 = vunpack.c.l.b16 %v493
    %v532 = vunpack.c.l.b16 %v494
    %v533 = vunpack.c.l.b16 %v495
    %v534 = vunpack.c.l.b16 %v496
    %v535 = vunpack.c.l.b16 %v497
    %v536 = vunpack.c.l.b16 %v498
    %v537 = vunpack.c.l.b16 %v499
    %v538 = vunpack.c.l.b16 %v500
    %v539 = vunpack.c.l.b16 %v501
    %v540 = vunpack.c.l.b16 %v502
    %v541 = vunpack.c.l.b16 %v503
    %v542 = vpack.c.b16 %v527, %v526
    %v543 = vpack.c.b16 %v529, %v528
    %v544 = vpack.c.b16 %v531, %v530
    %v545 = vpack.c.b16 %v533, %v532
    %v546 = vpack.c.b16 %v535, %v534
    %v547 = vpack.c.b16 %v537, %v536
    %v548 = vpack.c.b16 %v539, %v538
    %v549 = vpack.c.b16 %v541, %v540
    %558 = vmatpush.bf16.msra.mxu0 %v549
    %559 = vmatpush.bf16.msra.mxu0 %v548
    %560 = vmatpush.bf16.msra.mxu0 %v547
    %561 = vmatpush.bf16.msra.mxu0 %v546
    %562 = vmatpush.bf16.msra.mxu0 %v545
    %563 = vmatpush.bf16.msra.mxu0 %v544
    %564 = vmatpush.bf16.msra.mxu0 %v543
    %565 = vmatpush.bf16.msra.mxu0 %v542
    %566 = vmatmul.bf16.gmra.mxu0 %v506
    %v567 = vpop.f32.mrf.mxu0
    %v568 = vadd.f32 %v508, %v567
    %v569 = vpop.f32.mrf.mxu0
    %570 = vdwg.mxu0
    %v571 = vadd.f32 %v568, %v316
    %v572 = vmax.f32 %v571, 0.0
    %v573 = vld [vmem:[%s4] sm:$0xf]
    %v574 = vld [vmem:[%s4 + $0x4] sm:$0xf]
    %v575 = vld [vmem:[%s4 + $0x8] sm:$0xf]
    %v576 = vld [vmem:[%s4 + $0xc] sm:$0xf]
    %v577 = vld [vmem:[%s4 + $0x10] sm:$0xf]
    %v578 = vld [vmem:[%s4 + $0x14] sm:$0xf]
    %v579 = vld [vmem:[%s4 + $0x18] sm:$0xf]
    %v580 = vld [vmem:[%s4 + $0x1c] sm:$0xf]
    %v581 = vld [vmem:[%s4 + $0x20] sm:$0xf]
    %v582 = vld [vmem:[%s4 + $0x24] sm:$0xf]
    %v583 = vld [vmem:[%s4 + $0x28] sm:$0xf]
    %v584 = vld [vmem:[%s4 + $0x2c] sm:$0xf]
    %v585 = vld [vmem:[%s4 + $0x30] sm:$0xf]
    %v586 = vld [vmem:[%s4 + $0x34] sm:$0xf]
    %v587 = vld [vmem:[%s4 + $0x38] sm:$0xf]
    %v588 = vld [vmem:[%s4 + $0x3c] sm:$0xf]
    %v589 = vld [vmem:[%s5] sm:$0x1]
    %v590 = vpack.c.bf16 %v572, %v572
    %v592 = vperm.slane %v589, 0
    %v610 = vunpack.c.l.b16 %v573
    %v611 = vunpack.c.l.b16 %v574
    %v612 = vunpack.c.l.b16 %v575
    %v613 = vunpack.c.l.b16 %v576
    %v614 = vunpack.c.l.b16 %v577
    %v615 = vunpack.c.l.b16 %v578
    %v616 = vunpack.c.l.b16 %v579
    %v617 = vunpack.c.l.b16 %v580
    %v618 = vunpack.c.l.b16 %v581
    %v619 = vunpack.c.l.b16 %v582
    %v620 = vunpack.c.l.b16 %v583
    %v621 = vunpack.c.l.b16 %v584
    %v622 = vunpack.c.l.b16 %v585
    %v623 = vunpack.c.l.b16 %v586
    %v624 = vunpack.c.l.b16 %v587
    %v625 = vunpack.c.l.b16 %v588
    %v626 = vpack.c.b16 %v611, %v610
    %v627 = vpack.c.b16 %v613, %v612
    %v628 = vpack.c.b16 %v615, %v614
    %v629 = vpack.c.b16 %v617, %v616
    %v630 = vpack.c.b16 %v619, %v618
    %v631 = vpack.c.b16 %v621, %v620
    %v632 = vpack.c.b16 %v623, %v622
    %v633 = vpack.c.b16 %v625, %v624
    %642 = vmatpush.bf16.msra.mxu0 %v633
    %643 = vmatpush.bf16.msra.mxu0 %v632
    %644 = vmatpush.bf16.msra.mxu0 %v631
    %645 = vmatpush.bf16.msra.mxu0 %v630
    %646 = vmatpush.bf16.msra.mxu0 %v629
    %647 = vmatpush.bf16.msra.mxu0 %v628
    %648 = vmatpush.bf16.msra.mxu0 %v627
    %649 = vmatpush.bf16.msra.mxu0 %v626
    %650 = vmatmul.bf16.gmra.mxu0 %v590
    %v651 = vpop.f32.mrf.mxu0
    %v652 = vadd.f32 %v592, %v651
    %v653 = vpop.f32.mrf.mxu0
    %654 = vdwg.mxu0
    %655 = vst [vmem:[%s7] sm:$0x3] %v652
    %vm656 = vcmask 189440
    %657 = vst.msk [vmem:[#allocation2] sm:$0x3] %vm656, %v652
    %658 = vst.msk [vmem:[#allocation2 + $0x2] sm:$0x3] %vm656, %v652
    %659 = vst.msk [vmem:[#allocation2 + $0x4] sm:$0x3] %vm656, %v652
    %660 = vst.msk [vmem:[#allocation2 + $0x6] sm:$0x3] %vm656, %v652
    %v661 = vld [vmem:[#allocation2] sm:$0xff]
    %v662 = vld [vmem:[%s6] sm:$0xff]
    %v663 = vmul.f32 %v661, %v662
    %665 = vrot.lane.b32.xlu0 %v662, 112
    %v666 = vpop.permute.xlu0 %665
    %v668 = vmul.f32 %v661, %v666
    %670 = vrot.lane.b32.xlu0 %v668, 120
    %v671 = vpop.permute.xlu0 %670
    %v673 = vadd.f32 %v663, %v671
    %674 = vrot.lane.b32.xlu0 %v662, 96
    %v675 = vpop.permute.xlu0 %674
    %v677 = vmul.f32 %v661, %v675
    %679 = vrot.lane.b32.xlu0 %v677, 112
    %v680 = vpop.permute.xlu0 %679
    %v682 = vadd.f32 %v673, %v680
    %683 = vrot.lane.b32.xlu0 %v662, 120
    %v684 = vpop.permute.xlu0 %683
    %v686 = vmul.f32 %v661, %v684
    %687 = vrot.lane.b32.xlu0 %v662, 104
    %v688 = vpop.permute.xlu0 %687
    %v690 = vmul.f32 %v661, %v688
    %692 = vrot.lane.b32.xlu0 %v690, 120
    %v693 = vpop.permute.xlu0 %692
    %v695 = vadd.f32 %v686, %v693
    %696 = vrot.lane.b32.xlu0 %v662, 88
    %v697 = vpop.permute.xlu0 %696
    %v699 = vmul.f32 %v661, %v697
    %701 = vrot.lane.b32.xlu0 %v699, 112
    %v702 = vpop.permute.xlu0 %701
    %v704 = vadd.f32 %v695, %v702
    %705 = vrot.lane.b32.xlu0 %v677, 120
    %v706 = vpop.permute.xlu0 %705
    %v708 = vadd.f32 %v668, %v706
    %709 = vrot.lane.b32.xlu0 %v662, 80
    %v710 = vpop.permute.xlu0 %709
    %v712 = vmul.f32 %v661, %v710
    %714 = vrot.lane.b32.xlu0 %v712, 112
    %v715 = vpop.permute.xlu0 %714
    %v717 = vadd.f32 %v708, %v715
    %v718 = vadd.f32 %v717, 5.0
    %v719 = vmax.f32 %v718, 1.0
    %v720 = vrcp.pop %v719
    %v721 = vmul.f32 %v719, %v720
    %v722 = vsub.f32 1.0, %v721
    %v723 = vmul.f32 %v720, %v722
    %v724 = vadd.f32 %v720, %v723
    %vm725 = vweird.f32 %v719
    %vm726 = vweird.f32 %v720
    %vm727 = vmor %vm725, %vm726
    %v728 = vsel %vm727, %v720, %v724
    %v729 = vand.u32 2147483647, %v719
    %vm730 = vcmp.eq.f32.partialorder %v729, 8.507059e+37
    %v731 = vand.u32 %v719, 2147483648
    %v732 = vor.u32 1.1754944e-38, %v731
    %v733 = vsel %vm730, %v732, %v728
    %v734 = vmul.f32 1.0, %v733
    %v735 = vmul.f32 %v682, %v734
    %v736 = vmul.f32 %v704, %v734
    %vm737 = vcmask 64512
    %738 = vst.msk [vmem:[#allocation3] sm:$0xff] %vm737, %v735
    %740 = vrot.lane.b32.xlu0 %v736, 8
    %v741 = vpop.permute.xlu0 %740
    %vm743 = vcmask 130112
    %744 = vst.msk [vmem:[#allocation3] sm:$0xff] %vm743, %v741
    %v745 = vld [vmem:[#allocation3] sm:$0xff]
    %v746 = vld [vmem:[%s1] sm:$0xf]
    %v747 = vld [vmem:[%s1 + $0x4] sm:$0xf]
    %v748 = vpack.c.bf16 %v745, %v745
    %v751 = vunpack.c.l.b16 %v746
    %v752 = vunpack.c.l.b16 %v747
    %v753 = vpack.c.b16 %v752, %v751
    %v756 = vsel %vm44, %v748, 0
    %758 = vmatpush.bf16.msra.mxu0 0
    %759 = vmatpush.bf16.msra.mxu0 0
    %760 = vmatpush.bf16.msra.mxu0 0
    %761 = vmatpush.bf16.msra.mxu0 0
    %762 = vmatpush.bf16.msra.mxu0 0
    %763 = vmatpush.bf16.msra.mxu0 0
    %764 = vmatpush.bf16.msra.mxu0 0
    %765 = vmatpush.bf16.msra.mxu0 %v753
    %766 = vmatmul.bf16.gmra.mxu0 %v756
    %v767 = vpop.f32.mrf.mxu0
    %v768 = vadd.f32 %v36, %v767
    %v769 = vpop.f32.mrf.mxu0
    %770 = vdwg.mxu0
    %v771 = vmax.f32 %v768, 0.0
    %v772 = vld [vmem:[%s2] sm:$0xf]
    %v773 = vld [vmem:[%s2 + $0x4] sm:$0xf]
    %v774 = vld [vmem:[%s2 + $0x8] sm:$0xf]
    %v775 = vld [vmem:[%s2 + $0xc] sm:$0xf]
    %v776 = vld [vmem:[%s2 + $0x10] sm:$0xf]
    %v777 = vld [vmem:[%s2 + $0x14] sm:$0xf]
    %v778 = vld [vmem:[%s2 + $0x18] sm:$0xf]
    %v779 = vld [vmem:[%s2 + $0x1c] sm:$0xf]
    %v780 = vld [vmem:[%s2 + $0x20] sm:$0xf]
    %v781 = vld [vmem:[%s2 + $0x24] sm:$0xf]
    %v782 = vld [vmem:[%s2 + $0x28] sm:$0xf]
    %v783 = vld [vmem:[%s2 + $0x2c] sm:$0xf]
    %v784 = vld [vmem:[%s2 + $0x30] sm:$0xf]
    %v785 = vld [vmem:[%s2 + $0x34] sm:$0xf]
    %v786 = vld [vmem:[%s2 + $0x38] sm:$0xf]
    %v787 = vld [vmem:[%s2 + $0x3c] sm:$0xf]
    %v788 = vld [vmem:[%s78] sm:$0x1]
    %v789 = vpack.c.bf16 %v771, %v771
    %v791 = vperm.slane %v788, 0
    %v809 = vunpack.c.l.b16 %v772
    %v810 = vunpack.c.l.b16 %v773
    %v811 = vunpack.c.l.b16 %v774
    %v812 = vunpack.c.l.b16 %v775
    %v813 = vunpack.c.l.b16 %v776
    %v814 = vunpack.c.l.b16 %v777
    %v815 = vunpack.c.l.b16 %v778
    %v816 = vunpack.c.l.b16 %v779
    %v817 = vunpack.c.l.b16 %v780
    %v818 = vunpack.c.l.b16 %v781
    %v819 = vunpack.c.l.b16 %v782
    %v820 = vunpack.c.l.b16 %v783
    %v821 = vunpack.c.l.b16 %v784
    %v822 = vunpack.c.l.b16 %v785
    %v823 = vunpack.c.l.b16 %v786
    %v824 = vunpack.c.l.b16 %v787
    %v825 = vpack.c.b16 %v810, %v809
    %v826 = vpack.c.b16 %v812, %v811
    %v827 = vpack.c.b16 %v814, %v813
    %v828 = vpack.c.b16 %v816, %v815
    %v829 = vpack.c.b16 %v818, %v817
    %v830 = vpack.c.b16 %v820, %v819
    %v831 = vpack.c.b16 %v822, %v821
    %v832 = vpack.c.b16 %v824, %v823
    %841 = vmatpush.bf16.msra.mxu0 %v832
    %842 = vmatpush.bf16.msra.mxu0 %v831
    %843 = vmatpush.bf16.msra.mxu0 %v830
    %844 = vmatpush.bf16.msra.mxu0 %v829
    %845 = vmatpush.bf16.msra.mxu0 %v828
    %846 = vmatpush.bf16.msra.mxu0 %v827
    %847 = vmatpush.bf16.msra.mxu0 %v826
    %848 = vmatpush.bf16.msra.mxu0 %v825
    %849 = vmatmul.bf16.gmra.mxu0 %v789
    %v850 = vpop.f32.mrf.mxu0
    %v851 = vadd.f32 %v791, %v850
    %v852 = vpop.f32.mrf.mxu0
    %853 = vdwg.mxu0
    %v854 = vmax.f32 %v851, 0.0
    %v855 = vld [vmem:[%s146] sm:$0xf]
    %v856 = vld [vmem:[%s146 + $0x4] sm:$0xf]
    %v857 = vld [vmem:[%s146 + $0x8] sm:$0xf]
    %v858 = vld [vmem:[%s146 + $0xc] sm:$0xf]
    %v859 = vld [vmem:[%s146 + $0x10] sm:$0xf]
    %v860 = vld [vmem:[%s146 + $0x14] sm:$0xf]
    %v861 = vld [vmem:[%s146 + $0x18] sm:$0xf]
    %v862 = vld [vmem:[%s146 + $0x1c] sm:$0xf]
    %v863 = vld [vmem:[%s146 + $0x20] sm:$0xf]
    %v864 = vld [vmem:[%s146 + $0x24] sm:$0xf]
    %v865 = vld [vmem:[%s146 + $0x28] sm:$0xf]
    %v866 = vld [vmem:[%s146 + $0x2c] sm:$0xf]
    %v867 = vld [vmem:[%s146 + $0x30] sm:$0xf]
    %v868 = vld [vmem:[%s146 + $0x34] sm:$0xf]
    %v869 = vld [vmem:[%s146 + $0x38] sm:$0xf]
    %v870 = vld [vmem:[%s146 + $0x3c] sm:$0xf]
    %v871 = vld [vmem:[%s163] sm:$0x1]
    %v872 = vpack.c.bf16 %v854, %v854
    %v874 = vperm.slane %v871, 0
    %v892 = vunpack.c.l.b16 %v855
    %v893 = vunpack.c.l.b16 %v856
    %v894 = vunpack.c.l.b16 %v857
    %v895 = vunpack.c.l.b16 %v858
    %v896 = vunpack.c.l.b16 %v859
    %v897 = vunpack.c.l.b16 %v860
    %v898 = vunpack.c.l.b16 %v861
    %v899 = vunpack.c.l.b16 %v862
    %v900 = vunpack.c.l.b16 %v863
    %v901 = vunpack.c.l.b16 %v864
    %v902 = vunpack.c.l.b16 %v865
    %v903 = vunpack.c.l.b16 %v866
    %v904 = vunpack.c.l.b16 %v867
    %v905 = vunpack.c.l.b16 %v868
    %v906 = vunpack.c.l.b16 %v869
    %v907 = vunpack.c.l.b16 %v870
    %v908 = vpack.c.b16 %v893, %v892
    %v909 = vpack.c.b16 %v895, %v894
    %v910 = vpack.c.b16 %v897, %v896
    %v911 = vpack.c.b16 %v899, %v898
    %v912 = vpack.c.b16 %v901, %v900
    %v913 = vpack.c.b16 %v903, %v902
    %v914 = vpack.c.b16 %v905, %v904
    %v915 = vpack.c.b16 %v907, %v906
    %924 = vmatpush.bf16.msra.mxu0 %v915
    %925 = vmatpush.bf16.msra.mxu0 %v914
    %926 = vmatpush.bf16.msra.mxu0 %v913
    %927 = vmatpush.bf16.msra.mxu0 %v912
    %928 = vmatpush.bf16.msra.mxu0 %v911
    %929 = vmatpush.bf16.msra.mxu0 %v910
    %930 = vmatpush.bf16.msra.mxu0 %v909
    %931 = vmatpush.bf16.msra.mxu0 %v908
    %932 = vmatmul.bf16.gmra.mxu0 %v872
    %v933 = vpop.f32.mrf.mxu0
    %v934 = vadd.f32 %v874, %v933
    %v935 = vpop.f32.mrf.mxu0
    %936 = vdwg.mxu0
    %v937 = vmax.f32 %v934, 0.0
    %v938 = vld [vmem:[%s231] sm:$0xf]
    %v939 = vld [vmem:[%s231 + $0x4] sm:$0xf]
    %v940 = vld [vmem:[%s231 + $0x8] sm:$0xf]
    %v941 = vld [vmem:[%s231 + $0xc] sm:$0xf]
    %v942 = vld [vmem:[%s231 + $0x10] sm:$0xf]
    %v943 = vld [vmem:[%s231 + $0x14] sm:$0xf]
    %v944 = vld [vmem:[%s231 + $0x18] sm:$0xf]
    %v945 = vld [vmem:[%s231 + $0x1c] sm:$0xf]
    %v946 = vld [vmem:[%s231 + $0x20] sm:$0xf]
    %v947 = vld [vmem:[%s231 + $0x24] sm:$0xf]
    %v948 = vld [vmem:[%s231 + $0x28] sm:$0xf]
    %v949 = vld [vmem:[%s231 + $0x2c] sm:$0xf]
    %v950 = vld [vmem:[%s231 + $0x30] sm:$0xf]
    %v951 = vld [vmem:[%s231 + $0x34] sm:$0xf]
    %v952 = vld [vmem:[%s231 + $0x38] sm:$0xf]
    %v953 = vld [vmem:[%s231 + $0x3c] sm:$0xf]
    %v954 = vld [vmem:[%s248] sm:$0x1]
    %v955 = vpack.c.bf16 %v937, %v937
    %v957 = vperm.slane %v954, 0
    %v975 = vunpack.c.l.b16 %v938
    %v976 = vunpack.c.l.b16 %v939
    %v977 = vunpack.c.l.b16 %v940
    %v978 = vunpack.c.l.b16 %v941
    %v979 = vunpack.c.l.b16 %v942
    %v980 = vunpack.c.l.b16 %v943
    %v981 = vunpack.c.l.b16 %v944
    %v982 = vunpack.c.l.b16 %v945
    %v983 = vunpack.c.l.b16 %v946
    %v984 = vunpack.c.l.b16 %v947
    %v985 = vunpack.c.l.b16 %v948
    %v986 = vunpack.c.l.b16 %v949
    %v987 = vunpack.c.l.b16 %v950
    %v988 = vunpack.c.l.b16 %v951
    %v989 = vunpack.c.l.b16 %v952
    %v990 = vunpack.c.l.b16 %v953
    %v991 = vpack.c.b16 %v976, %v975
    %v992 = vpack.c.b16 %v978, %v977
    %v993 = vpack.c.b16 %v980, %v979
    %v994 = vpack.c.b16 %v982, %v981
    %v995 = vpack.c.b16 %v984, %v983
    %v996 = vpack.c.b16 %v986, %v985
    %v997 = vpack.c.b16 %v988, %v987
    %v998 = vpack.c.b16 %v990, %v989
    %1007 = vmatpush.bf16.msra.mxu0 %v998
    %1008 = vmatpush.bf16.msra.mxu0 %v997
    %1009 = vmatpush.bf16.msra.mxu0 %v996
    %1010 = vmatpush.bf16.msra.mxu0 %v995
    %1011 = vmatpush.bf16.msra.mxu0 %v994
    %1012 = vmatpush.bf16.msra.mxu0 %v993
    %1013 = vmatpush.bf16.msra.mxu0 %v992
    %1014 = vmatpush.bf16.msra.mxu0 %v991
    %1015 = vmatmul.bf16.gmra.mxu0 %v955
    %v1016 = vpop.f32.mrf.mxu0
    %v1017 = vadd.f32 %v957, %v1016
    %v1018 = vpop.f32.mrf.mxu0
    %1019 = vdwg.mxu0
    %v1020 = vadd.f32 %v1017, %v771
    %v1021 = vmax.f32 %v1020, 0.0
    %v1022 = vld [vmem:[%s317] sm:$0xf]
    %v1023 = vld [vmem:[%s317 + $0x4] sm:$0xf]
    %v1024 = vld [vmem:[%s317 + $0x8] sm:$0xf]
    %v1025 = vld [vmem:[%s317 + $0xc] sm:$0xf]
    %v1026 = vld [vmem:[%s317 + $0x10] sm:$0xf]
    %v1027 = vld [vmem:[%s317 + $0x14] sm:$0xf]
    %v1028 = vld [vmem:[%s317 + $0x18] sm:$0xf]
    %v1029 = vld [vmem:[%s317 + $0x1c] sm:$0xf]
    %v1030 = vld [vmem:[%s317 + $0x20] sm:$0xf]
    %v1031 = vld [vmem:[%s317 + $0x24] sm:$0xf]
    %v1032 = vld [vmem:[%s317 + $0x28] sm:$0xf]
    %v1033 = vld [vmem:[%s317 + $0x2c] sm:$0xf]
    %v1034 = vld [vmem:[%s317 + $0x30] sm:$0xf]
    %v1035 = vld [vmem:[%s317 + $0x34] sm:$0xf]
    %v1036 = vld [vmem:[%s317 + $0x38] sm:$0xf]
    %v1037 = vld [vmem:[%s317 + $0x3c] sm:$0xf]
    %v1038 = vld [vmem:[%s334] sm:$0x1]
    %v1039 = vpack.c.bf16 %v1021, %v1021
    %v1041 = vperm.slane %v1038, 0
    %v1059 = vunpack.c.l.b16 %v1022
    %v1060 = vunpack.c.l.b16 %v1023
    %v1061 = vunpack.c.l.b16 %v1024
    %v1062 = vunpack.c.l.b16 %v1025
    %v1063 = vunpack.c.l.b16 %v1026
    %v1064 = vunpack.c.l.b16 %v1027
    %v1065 = vunpack.c.l.b16 %v1028
    %v1066 = vunpack.c.l.b16 %v1029
    %v1067 = vunpack.c.l.b16 %v1030
    %v1068 = vunpack.c.l.b16 %v1031
    %v1069 = vunpack.c.l.b16 %v1032
    %v1070 = vunpack.c.l.b16 %v1033
    %v1071 = vunpack.c.l.b16 %v1034
    %v1072 = vunpack.c.l.b16 %v1035
    %v1073 = vunpack.c.l.b16 %v1036
    %v1074 = vunpack.c.l.b16 %v1037
    %v1075 = vpack.c.b16 %v1060, %v1059
    %v1076 = vpack.c.b16 %v1062, %v1061
    %v1077 = vpack.c.b16 %v1064, %v1063
    %v1078 = vpack.c.b16 %v1066, %v1065
    %v1079 = vpack.c.b16 %v1068, %v1067
    %v1080 = vpack.c.b16 %v1070, %v1069
    %v1081 = vpack.c.b16 %v1072, %v1071
    %v1082 = vpack.c.b16 %v1074, %v1073
    %1091 = vmatpush.bf16.msra.mxu0 %v1082
    %1092 = vmatpush.bf16.msra.mxu0 %v1081
    %1093 = vmatpush.bf16.msra.mxu0 %v1080
    %1094 = vmatpush.bf16.msra.mxu0 %v1079
    %1095 = vmatpush.bf16.msra.mxu0 %v1078
    %1096 = vmatpush.bf16.msra.mxu0 %v1077
    %1097 = vmatpush.bf16.msra.mxu0 %v1076
    %1098 = vmatpush.bf16.msra.mxu0 %v1075
    %1099 = vmatmul.bf16.gmra.mxu0 %v1039
    %v1100 = vpop.f32.mrf.mxu0
    %v1101 = vadd.f32 %v1041, %v1100
    %v1102 = vpop.f32.mrf.mxu0
    %1103 = vdwg.mxu0
    %v1104 = vmax.f32 %v1101, 0.0
    %v1105 = vld [vmem:[%s402] sm:$0xf]
    %v1106 = vld [vmem:[%s402 + $0x4] sm:$0xf]
    %v1107 = vld [vmem:[%s402 + $0x8] sm:$0xf]
    %v1108 = vld [vmem:[%s402 + $0xc] sm:$0xf]
    %v1109 = vld [vmem:[%s402 + $0x10] sm:$0xf]
    %v1110 = vld [vmem:[%s402 + $0x14] sm:$0xf]
    %v1111 = vld [vmem:[%s402 + $0x18] sm:$0xf]
    %v1112 = vld [vmem:[%s402 + $0x1c] sm:$0xf]
    %v1113 = vld [vmem:[%s402 + $0x20] sm:$0xf]
    %v1114 = vld [vmem:[%s402 + $0x24] sm:$0xf]
    %v1115 = vld [vmem:[%s402 + $0x28] sm:$0xf]
    %v1116 = vld [vmem:[%s402 + $0x2c] sm:$0xf]
    %v1117 = vld [vmem:[%s402 + $0x30] sm:$0xf]
    %v1118 = vld [vmem:[%s402 + $0x34] sm:$0xf]
    %v1119 = vld [vmem:[%s402 + $0x38] sm:$0xf]
    %v1120 = vld [vmem:[%s402 + $0x3c] sm:$0xf]
    %v1121 = vld [vmem:[%s419] sm:$0x1]
    %v1122 = vpack.c.bf16 %v1104, %v1104
    %v1124 = vperm.slane %v1121, 0
    %v1142 = vunpack.c.l.b16 %v1105
    %v1143 = vunpack.c.l.b16 %v1106
    %v1144 = vunpack.c.l.b16 %v1107
    %v1145 = vunpack.c.l.b16 %v1108
    %v1146 = vunpack.c.l.b16 %v1109
    %v1147 = vunpack.c.l.b16 %v1110
    %v1148 = vunpack.c.l.b16 %v1111
    %v1149 = vunpack.c.l.b16 %v1112
    %v1150 = vunpack.c.l.b16 %v1113
    %v1151 = vunpack.c.l.b16 %v1114
    %v1152 = vunpack.c.l.b16 %v1115
    %v1153 = vunpack.c.l.b16 %v1116
    %v1154 = vunpack.c.l.b16 %v1117
    %v1155 = vunpack.c.l.b16 %v1118
    %v1156 = vunpack.c.l.b16 %v1119
    %v1157 = vunpack.c.l.b16 %v1120
    %v1158 = vpack.c.b16 %v1143, %v1142
    %v1159 = vpack.c.b16 %v1145, %v1144
    %v1160 = vpack.c.b16 %v1147, %v1146
    %v1161 = vpack.c.b16 %v1149, %v1148
    %v1162 = vpack.c.b16 %v1151, %v1150
    %v1163 = vpack.c.b16 %v1153, %v1152
    %v1164 = vpack.c.b16 %v1155, %v1154
    %v1165 = vpack.c.b16 %v1157, %v1156
    %1174 = vmatpush.bf16.msra.mxu0 %v1165
    %1175 = vmatpush.bf16.msra.mxu0 %v1164
    %1176 = vmatpush.bf16.msra.mxu0 %v1163
    %1177 = vmatpush.bf16.msra.mxu0 %v1162
    %1178 = vmatpush.bf16.msra.mxu0 %v1161
    %1179 = vmatpush.bf16.msra.mxu0 %v1160
    %1180 = vmatpush.bf16.msra.mxu0 %v1159
    %1181 = vmatpush.bf16.msra.mxu0 %v1158
    %1182 = vmatmul.bf16.gmra.mxu0 %v1122
    %v1183 = vpop.f32.mrf.mxu0
    %v1184 = vadd.f32 %v1124, %v1183
    %v1185 = vpop.f32.mrf.mxu0
    %1186 = vdwg.mxu0
    %v1187 = vmax.f32 %v1184, 0.0
    %v1188 = vld [vmem:[%s487] sm:$0xf]
    %v1189 = vld [vmem:[%s487 + $0x4] sm:$0xf]
    %v1190 = vld [vmem:[%s487 + $0x8] sm:$0xf]
    %v1191 = vld [vmem:[%s487 + $0xc] sm:$0xf]
    %v1192 = vld [vmem:[%s487 + $0x10] sm:$0xf]
    %v1193 = vld [vmem:[%s487 + $0x14] sm:$0xf]
    %v1194 = vld [vmem:[%s487 + $0x18] sm:$0xf]
    %v1195 = vld [vmem:[%s487 + $0x1c] sm:$0xf]
    %v1196 = vld [vmem:[%s487 + $0x20] sm:$0xf]
    %v1197 = vld [vmem:[%s487 + $0x24] sm:$0xf]
    %v1198 = vld [vmem:[%s487 + $0x28] sm:$0xf]
    %v1199 = vld [vmem:[%s487 + $0x2c] sm:$0xf]
    %v1200 = vld [vmem:[%s487 + $0x30] sm:$0xf]
    %v1201 = vld [vmem:[%s487 + $0x34] sm:$0xf]
    %v1202 = vld [vmem:[%s487 + $0x38] sm:$0xf]
    %v1203 = vld [vmem:[%s487 + $0x3c] sm:$0xf]
    %v1204 = vld [vmem:[%s504] sm:$0x1]
    %v1205 = vpack.c.bf16 %v1187, %v1187
    %v1207 = vperm.slane %v1204, 0
    %v1225 = vunpack.c.l.b16 %v1188
    %v1226 = vunpack.c.l.b16 %v1189
    %v1227 = vunpack.c.l.b16 %v1190
    %v1228 = vunpack.c.l.b16 %v1191
    %v1229 = vunpack.c.l.b16 %v1192
    %v1230 = vunpack.c.l.b16 %v1193
    %v1231 = vunpack.c.l.b16 %v1194
    %v1232 = vunpack.c.l.b16 %v1195
    %v1233 = vunpack.c.l.b16 %v1196
    %v1234 = vunpack.c.l.b16 %v1197
    %v1235 = vunpack.c.l.b16 %v1198
    %v1236 = vunpack.c.l.b16 %v1199
    %v1237 = vunpack.c.l.b16 %v1200
    %v1238 = vunpack.c.l.b16 %v1201
    %v1239 = vunpack.c.l.b16 %v1202
    %v1240 = vunpack.c.l.b16 %v1203
    %v1241 = vpack.c.b16 %v1226, %v1225
    %v1242 = vpack.c.b16 %v1228, %v1227
    %v1243 = vpack.c.b16 %v1230, %v1229
    %v1244 = vpack.c.b16 %v1232, %v1231
    %v1245 = vpack.c.b16 %v1234, %v1233
    %v1246 = vpack.c.b16 %v1236, %v1235
    %v1247 = vpack.c.b16 %v1238, %v1237
    %v1248 = vpack.c.b16 %v1240, %v1239
    %1257 = vmatpush.bf16.msra.mxu0 %v1248
    %1258 = vmatpush.bf16.msra.mxu0 %v1247
    %1259 = vmatpush.bf16.msra.mxu0 %v1246
    %1260 = vmatpush.bf16.msra.mxu0 %v1245
    %1261 = vmatpush.bf16.msra.mxu0 %v1244
    %1262 = vmatpush.bf16.msra.mxu0 %v1243
    %1263 = vmatpush.bf16.msra.mxu0 %v1242
    %1264 = vmatpush.bf16.msra.mxu0 %v1241
    %1265 = vmatmul.bf16.gmra.mxu0 %v1205
    %v1266 = vpop.f32.mrf.mxu0
    %v1267 = vadd.f32 %v1207, %v1266
    %v1268 = vpop.f32.mrf.mxu0
    %1269 = vdwg.mxu0
    %v1270 = vadd.f32 %v1267, %v1021
    %v1271 = vmax.f32 %v1270, 0.0
    %v1272 = vld [vmem:[%s4] sm:$0xf]
    %v1273 = vld [vmem:[%s4 + $0x4] sm:$0xf]
    %v1274 = vld [vmem:[%s4 + $0x8] sm:$0xf]
    %v1275 = vld [vmem:[%s4 + $0xc] sm:$0xf]
    %v1276 = vld [vmem:[%s4 + $0x10] sm:$0xf]
    %v1277 = vld [vmem:[%s4 + $0x14] sm:$0xf]
    %v1278 = vld [vmem:[%s4 + $0x18] sm:$0xf]
    %v1279 = vld [vmem:[%s4 + $0x1c] sm:$0xf]
    %v1280 = vld [vmem:[%s4 + $0x20] sm:$0xf]
    %v1281 = vld [vmem:[%s4 + $0x24] sm:$0xf]
    %v1282 = vld [vmem:[%s4 + $0x28] sm:$0xf]
    %v1283 = vld [vmem:[%s4 + $0x2c] sm:$0xf]
    %v1284 = vld [vmem:[%s4 + $0x30] sm:$0xf]
    %v1285 = vld [vmem:[%s4 + $0x34] sm:$0xf]
    %v1286 = vld [vmem:[%s4 + $0x38] sm:$0xf]
    %v1287 = vld [vmem:[%s4 + $0x3c] sm:$0xf]
    %v1288 = vld [vmem:[%s5] sm:$0x1]
    %v1289 = vpack.c.bf16 %v1271, %v1271
    %v1291 = vperm.slane %v1288, 0
    %v1309 = vunpack.c.l.b16 %v1272
    %v1310 = vunpack.c.l.b16 %v1273
    %v1311 = vunpack.c.l.b16 %v1274
    %v1312 = vunpack.c.l.b16 %v1275
    %v1313 = vunpack.c.l.b16 %v1276
    %v1314 = vunpack.c.l.b16 %v1277
    %v1315 = vunpack.c.l.b16 %v1278
    %v1316 = vunpack.c.l.b16 %v1279
    %v1317 = vunpack.c.l.b16 %v1280
    %v1318 = vunpack.c.l.b16 %v1281
    %v1319 = vunpack.c.l.b16 %v1282
    %v1320 = vunpack.c.l.b16 %v1283
    %v1321 = vunpack.c.l.b16 %v1284
    %v1322 = vunpack.c.l.b16 %v1285
    %v1323 = vunpack.c.l.b16 %v1286
    %v1324 = vunpack.c.l.b16 %v1287
    %v1325 = vpack.c.b16 %v1310, %v1309
    %v1326 = vpack.c.b16 %v1312, %v1311
    %v1327 = vpack.c.b16 %v1314, %v1313
    %v1328 = vpack.c.b16 %v1316, %v1315
    %v1329 = vpack.c.b16 %v1318, %v1317
    %v1330 = vpack.c.b16 %v1320, %v1319
    %v1331 = vpack.c.b16 %v1322, %v1321
    %v1332 = vpack.c.b16 %v1324, %v1323
    %1341 = vmatpush.bf16.msra.mxu0 %v1332
    %1342 = vmatpush.bf16.msra.mxu0 %v1331
    %1343 = vmatpush.bf16.msra.mxu0 %v1330
    %1344 = vmatpush.bf16.msra.mxu0 %v1329
    %1345 = vmatpush.bf16.msra.mxu0 %v1328
    %1346 = vmatpush.bf16.msra.mxu0 %v1327
    %1347 = vmatpush.bf16.msra.mxu0 %v1326
    %1348 = vmatpush.bf16.msra.mxu0 %v1325
    %1349 = vmatmul.bf16.gmra.mxu0 %v1289
    %v1350 = vpop.f32.mrf.mxu0
    %v1351 = vadd.f32 %v1291, %v1350
    %v1352 = vpop.f32.mrf.mxu0
    %1353 = vdwg.mxu0
    %v1354 = vsub.f32 %v1351, %v661
    %v1355 = vmul.f32 %v1354, %v1354
    %1357 = vrot.lane.b32.xlu0 %v1355, 120
    %v1358 = vpop.permute.xlu0 %1357
    %v1360 = vadd.f32 %v1355, %v1358
    %1361 = vrot.lane.b32.xlu0 %v1355, 112
    %v1362 = vpop.permute.xlu0 %1361
    %v1364 = vadd.f32 %v1360, %v1362
    %v1365 = vrsqrt.pop %v1364
    %v1366 = vmul.f32 %v1365, %v1364
    %v1367 = vmul.f32 %v1366, %v1365
    %v1368 = vmul.f32 0.5, %v1367
    %v1369 = vsub.f32 1.5, %v1368
    %v1370 = vmul.f32 %v1365, %v1369
    %v1371 = vmul.f32 %v1364, %v1370
    %vm1372 = vcmp.eq.f32.partialorder %v1364, inf
    %v1373 = vsel %vm1372, %v1364, %v1371
    %vm1374 = vcmp.eq.f32.partialorder %v1364, 0.0
    %v1375 = vand.u32 %v1364, 2147483648
    %v1376 = vsel %vm1374, %v1375, %v1373
    %v1377 = vsel %vm737, %v1376, 0.0
    %1378 = vadd.xlane.f32.xlu0 %v1377
    %v1379 = vpop.xlane.xlu0 %1378
    %v1380 = vrot.slane %v1379, 4
    %v1381 = vadd.f32 %v1379, %v1380
    %v1382 = vrot.slane %v1381, 2
    %v1383 = vadd.f32 %v1381, %v1382
    %v1384 = vrot.slane %v1383, 1
    %v1385 = vadd.f32 %v1383, %v1384
    %s1386 = vtos %v1385
    %v1387 = vstv %s1386
    %v1388 = vrcp.pop 64.0
    %v1389 = vmul.f32 64.0, %v1388
    %v1390 = vsub.f32 1.0, %v1389
    %v1391 = vmul.f32 %v1388, %v1390
    %v1392 = vadd.f32 %v1388, %v1391
    %vm1393 = vweird.f32 %v1388
    %v1394 = vsel %vm1393, %v1388, %v1392
    %v1395 = vmul.f32 %v1387, %v1394
    %1396 = vst [vmem:[#allocation4] sm:$0x1] %v1395
    // Predicated region
    $region30: #{teacher_forward.1} parent=1 // pred_check
      _
    $region31: #{teacher_forward.1} parent=1 // pred_check_branch
      %1398 = sbr.rel (0) target = $region33
    $region32: #{teacher_forward.1} parent=1 // pred_region
      _
    $region33: #{teacher_forward.1} parent=1 // pred_fallthru
      _
    // Predicated region
    $region34: #{teacher_forward.1} parent=1 // pred_check
      _
    $region35: #{teacher_forward.1} parent=1 // pred_check_branch
      %1400 = sbr.rel (0) target = $region37
    $region36: #{teacher_forward.1} parent=1 // pred_region
      %1402 = vsyncadd [#allocation5], 0
      %s1404 = sshll.u32 [#allocation4], 4
      %s1405 = int_to_ptr.vmem [resolvable:$true] %s1404
      %s1406 = sshll.u32 %s8, 4
      %s1407 = int_to_ptr.hbm [resolvable:$true] %s1406
      %1409 = dma.vmem_to_hbm [thread:$0]  %s1405, 16, %s1407, [#allocation5]
    $region37: #{teacher_forward.1} parent=1 // pred_fallthru
      _
    // Predicated region
    $region38: #{teacher_forward.1} parent=1 // pred_check
      _
    $region39: #{teacher_forward.1} parent=1 // pred_check_branch
      %1411 = sbr.rel (0) target = $region41
    $region40: #{teacher_forward.1} parent=1 // pred_region
      _
    $region41: #{teacher_forward.1} parent=1 // pred_fallthru
      _
    // Predicated region
    $region42: #{teacher_forward.1} parent=1 // pred_check
      _
    $region43: #{teacher_forward.1} parent=1 // pred_check_branch
      %1413 = sbr.rel (0) target = $region45
    $region44: #{teacher_forward.1} parent=1 // pred_region
      %1415 = dma.done [#allocation5], 16
    $region45: #{teacher_forward.1} parent=1 // pred_fallthru
      _
    %1416 = vsyncpa [#allocation5], 1

</llo_original>
